<compile_context>
chip_gen: v7x
topology: tpu7x:2x2x1
jax: 0.10.0
libtpu: 0.0.40
codegen_flags: <defaults>
</compile_context>

<pallas_src>
import functools

import numpy as np
import jax
import jax.numpy as jnp
from jax.experimental import pallas as pl
from jax.experimental.pallas import tpu as pltpu

LN_EPS = 1e-5
MASK_NEG = -1e30  # large finite negative instead of -inf (no NaN risk)


# ----------------------------------------------------------------------------
# adaptive_mask (host-side glue, exact port of the torch helper)
# ----------------------------------------------------------------------------
def adaptive_mask_np(aa, bb, ada_para=0.5):
    t = np.zeros((aa, bb), dtype=np.float32)
    adaptive_num = int(bb * ada_para)
    cc = int(bb / aa)
    for i in range(aa):
        start_col = i * cc
        end_col = start_col + cc + adaptive_num
        if end_col > bb - 1:
            tmp = end_col - (bb - 1)
            start_col = start_col - tmp
            if start_col < 0:
                start_col = 0
            end_col = bb
        t[i, start_col:end_col] = 1
    # ~tensor.bool(): 1 == masked (disallowed) position
    return (1.0 - t).astype(np.float32)


# ----------------------------------------------------------------------------
# Fused Frame_Layer kernel (one grid step == one batch element, all heads)
# ----------------------------------------------------------------------------
def frame_layer_kernel(tgt_ref, mem_ref, bias_ref,
                       wqkv_ref, bqkv_ref, wo_ref, bo_ref,
                       w1_ref, b1_ref, w2_ref, b2_ref, ln_ref,
                       out_ref, attnw_ref, *, nhead, head_dim):
    f32 = jnp.float32

    def layer_norm(x, g, b):
        mu = jnp.mean(x, axis=-1, keepdims=True)
        var = jnp.mean(jnp.square(x - mu), axis=-1, keepdims=True)
        return (x - mu) * jax.lax.rsqrt(var + LN_EPS) * g + b

    # packed LayerNorm params: rows = [g1,b1,g2,b2,g3,b3,g4,b4], shape (8, D)
    ln = ln_ref[...].astype(f32)
    g1, b1n = ln[0:1, :], ln[1:2, :]
    g2, b2n = ln[2:3, :], ln[3:4, :]
    g3, b3n = ln[4:5, :], ln[5:6, :]
    g4, b4n = ln[6:7, :], ln[7:8, :]

    # --- tgt = norm1(tgt); memory = norm2(memory) ---------------------------
    x_t = layer_norm(tgt_ref[...].astype(f32), g1, b1n)   # (T, D)
    x_m = layer_norm(mem_ref[...].astype(f32), g2, b2n)   # (S, D)
    d_model = x_t.shape[-1]

    # --- QKV projections (q from tgt, k/v from memory) ----------------------
    wqkv = wqkv_ref[...].astype(f32)                       # (D, 3D)
    bqkv = bqkv_ref[...].astype(f32)                       # (1, 3D)
    q = jnp.dot(x_t, wqkv[:, 0:d_model],
                preferred_element_type=f32) + bqkv[:, 0:d_model]            # (T, D)
    k = jnp.dot(x_m, wqkv[:, d_model:2 * d_model],
                preferred_element_type=f32) + bqkv[:, d_model:2 * d_model]  # (S, D)
    v = jnp.dot(x_m, wqkv[:, 2 * d_model:3 * d_model],
                preferred_element_type=f32) + bqkv[:, 2 * d_model:3 * d_model]  # (S, D)

    # pre-scale q (T*Dh elements) instead of the (T, S) score matrix per head.
    # head_dim is a *static* Python int here (bound via functools.partial).
    q = q * (1.0 / float(head_dim) ** 0.5)

    bias = bias_ref[...].astype(f32)                       # (T, S) 0 / -1e30
    dn = (((1,), (1,)), ((), ()))                          # contract last dims

    ctx_heads = []
    w_acc = jnp.zeros(bias.shape, f32)
    for h in range(nhead):                                 # static, unrolled
        lo, hi = h * head_dim, (h + 1) * head_dim
        q_h = q[:, lo:hi]                                  # (T, Dh)
        k_h = k[:, lo:hi]                                  # (S, Dh)
        v_h = v[:, lo:hi]                                  # (S, Dh)

        s_h = jax.lax.dot_general(q_h, k_h, dn,
                                  preferred_element_type=f32) + bias        # (T, S)
        m_h = jnp.max(s_h, axis=-1, keepdims=True)
        e_h = jnp.exp(s_h - m_h)
        inv = pl.reciprocal(jnp.sum(e_h, axis=-1, keepdims=True), approx=True)
        p_h = e_h * inv                                    # softmax, (T, S)

        w_acc = w_acc + p_h
        ctx_heads.append(jnp.dot(p_h, v_h, preferred_element_type=f32))     # (T, Dh)

    # head-averaged attention weights (PyTorch average_attn_weights=True)
    attnw_ref[0] = (w_acc * (1.0 / float(nhead))).astype(attnw_ref.dtype)

    # --- output projection + residual + LN3 ---------------------------------
    ctx = jnp.concatenate(ctx_heads, axis=-1)              # (T, D)
    tgt2 = jnp.dot(ctx, wo_ref[...].astype(f32),
                   preferred_element_type=f32) + bo_ref[...].astype(f32)

    x = x_t + tgt2                                         # dropout1 = identity
    x = layer_norm(x, g3, b3n)

    # --- FFN + residual + LN4 ------------------------------------------------
    ff = jnp.dot(x, w1_ref[...].astype(f32),
                 preferred_element_type=f32) + b1_ref[...].astype(f32)
    ff = jnp.maximum(ff, 0.0)                              # ReLU (dropout = id)
    ff = jnp.dot(ff, w2_ref[...].astype(f32),
                 preferred_element_type=f32) + b2_ref[...].astype(f32)

    x = layer_norm(x + ff, g4, b4n)                        # dropout2 = identity
    out_ref[...] = x.astype(out_ref.dtype)


# ----------------------------------------------------------------------------
# Frame_Layer forward (single fused pallas_call, grid over batch)
# ----------------------------------------------------------------------------
def frame_layer_forward(params, tgt, memory, *, nhead):
    T, B, D = tgt.shape
    S = memory.shape[0]
    H = int(nhead)                                         # static Python int
    assert D % H == 0, "d_model must be divisible by nhead"
    Dh = D // H
    F = params["lin1_w"].shape[0]

    # batch-major 2D activation slabs (seq-major interface -> batch blocks)
    tgt2d = tgt.transpose(1, 0, 2).reshape(B * T, D)
    mem2d = memory.transpose(1, 0, 2).reshape(B * S, D)

    wqkv_t = params["in_proj_w"].T                         # (D, 3D)
    bqkv = params["in_proj_b"].reshape(1, 3 * D)
    wo_t = params["out_proj_w"].T                          # (D, D)
    bo = params["out_proj_b"].reshape(1, D)
    w1_t = params["lin1_w"].T                              # (D, F)
    b1 = params["lin1_b"].reshape(1, F)
    w2_t = params["lin2_w"].T                              # (F, D)
    b2 = params["lin2_b"].reshape(1, D)
    ln = jnp.stack([params["norm1_g"], params["norm1_b"],
                    params["norm2_g"], params["norm2_b"],
                    params["norm3_g"], params["norm3_b"],
                    params["norm4_g"], params["norm4_b"]], axis=0)  # (8, D)
    mask_bias = params["attn_mask_bias"]                   # (T, S) f32

    const2d = lambda shape: pl.BlockSpec(shape, lambda b: (0, 0))

    out2d, attn_weights = pl.pallas_call(
        functools.partial(frame_layer_kernel, nhead=H, head_dim=Dh),
        out_shape=(
            jax.ShapeDtypeStruct((B * T, D), tgt.dtype),
            jax.ShapeDtypeStruct((B, T, S), jnp.float32),
        ),
        grid=(B,),
        in_specs=[
            pl.BlockSpec((T, D), lambda b: (b, 0)),        # tgt rows of batch b
            pl.BlockSpec((S, D), lambda b: (b, 0)),        # memory rows of batch b
            const2d((T, S)),                               # mask bias (shared)
            const2d((D, 3 * D)),                           # wqkv^T
            const2d((1, 3 * D)),                           # bqkv
            const2d((D, D)),                               # wo^T
            const2d((1, D)),                               # bo
            const2d((D, F)),                               # w1^T
            const2d((1, F)),                               # b1
            const2d((F, D)),                               # w2^T
            const2d((1, D)),                               # b2
            const2d((8, D)),                               # packed LN params
        ],
        out_specs=(
            pl.BlockSpec((T, D), lambda b: (b, 0)),        # fused layer output
            pl.BlockSpec((1, T, S), lambda b: (b, 0, 0)),  # avg attention weights
        ),
        compiler_params=pltpu.CompilerParams(
            dimension_semantics=("parallel",),             # batch -> megacore on v7x
            vmem_limit_bytes=32 * 1024 * 1024,             # safe on v5e/v6e/v7x
        ),
    )(tgt2d, mem2d, mask_bias, wqkv_t, bqkv, wo_t, bo, w1_t, b1, w2_t, b2, ln)

    out = out2d.reshape(B, T, D).transpose(1, 0, 2)        # back to (T, B, D)
    return out, attn_weights                               # weights: (B, T, S)


# ----------------------------------------------------------------------------
# Deterministic parameter construction (synthetic weights)
# ----------------------------------------------------------------------------
def init_params(key, d_model, dim_ff, T, S):
    ks = jax.random.split(key, 4)
    mask = adaptive_mask_np(T, S, ada_para=0.2)            # 1 == masked
    p = {
        "in_proj_w": 0.05 * jax.random.normal(ks[0], (3 * d_model, d_model), jnp.float32),
        "in_proj_b": jnp.zeros((3 * d_model,), jnp.float32),
        "out_proj_w": 0.05 * jax.random.normal(ks[1], (d_model, d_model), jnp.float32),
        "out_proj_b": jnp.zeros((d_model,), jnp.float32),
        "lin1_w": 0.05 * jax.random.normal(ks[2], (dim_ff, d_model), jnp.float32),
        "lin1_b": jnp.zeros((dim_ff,), jnp.float32),
        "lin2_w": 0.05 * jax.random.normal(ks[3], (d_model, dim_ff), jnp.float32),
        "lin2_b": jnp.zeros((d_model,), jnp.float32),
        "norm1_g": jnp.ones((d_model,), jnp.float32),
        "norm1_b": jnp.zeros((d_model,), jnp.float32),
        "norm2_g": jnp.ones((d_model,), jnp.float32),
        "norm2_b": jnp.zeros((d_model,), jnp.float32),
        "norm3_g": jnp.ones((d_model,), jnp.float32),
        "norm3_b": jnp.zeros((d_model,), jnp.float32),
        "norm4_g": jnp.ones((d_model,), jnp.float32),
        "norm4_b": jnp.zeros((d_model,), jnp.float32),
        # additive mask bias: 0 where allowed, -1e30 where masked
        "attn_mask_bias": jnp.asarray(mask * MASK_NEG, jnp.float32),
    }
    return p


if __name__ == "__main__":
    d_model, nhead, dim_ff = 32, 4, 64
    T, S, B = 8, 16, 2            # tgt seq len, memory seq len, batch

    key = jax.random.PRNGKey(0)
    k_tgt, k_mem, k_par = jax.random.split(key, 3)
    tgt = jax.random.normal(k_tgt, (T, B, d_model), jnp.float32)
    memory = jax.random.normal(k_mem, (S, B, d_model), jnp.float32)

    params = init_params(k_par, d_model, dim_ff, T, S)

    # nhead stays a static Python int (bound via partial, NOT traced by jit)
    fwd = jax.jit(functools.partial(frame_layer_forward, nhead=nhead))
    out, attn_weights = fwd(params, tgt, memory)
    jax.block_until_ready((out, attn_weights))

    assert out.shape == (T, B, d_model)
    assert attn_weights.shape == (B, T, S)
    assert bool(jnp.all(jnp.isfinite(out))) and bool(jnp.all(jnp.isfinite(attn_weights)))
    print("KERNEL_OK")
</pallas_src>

<mosaic_0001>
module attributes {stable_mosaic.version = 11 : i64} {
  func.func @frame_layer_kernel(%arg0: i32, %arg1: memref<8x32xf32, #tpu.memory_space<vmem>>, %arg2: memref<16x32xf32, #tpu.memory_space<vmem>>, %arg3: memref<8x16xf32, #tpu.memory_space<vmem>>, %arg4: memref<32x96xf32, #tpu.memory_space<vmem>>, %arg5: memref<1x96xf32, #tpu.memory_space<vmem>>, %arg6: memref<32x32xf32, #tpu.memory_space<vmem>>, %arg7: memref<1x32xf32, #tpu.memory_space<vmem>>, %arg8: memref<32x64xf32, #tpu.memory_space<vmem>>, %arg9: memref<1x64xf32, #tpu.memory_space<vmem>>, %arg10: memref<64x32xf32, #tpu.memory_space<vmem>>, %arg11: memref<1x32xf32, #tpu.memory_space<vmem>>, %arg12: memref<8x32xf32, #tpu.memory_space<vmem>>, %arg13: memref<8x32xf32, #tpu.memory_space<vmem>>, %arg14: memref<1x8x16xf32, #tpu.memory_space<vmem>>) attributes {dimension_semantics = [#tpu.dimension_semantics<parallel>], iteration_bounds = array<i64: 2>, scalar_prefetch = 0 : i64, scratch_operands = 0 : i64, tpu.core_type = #tpu.core_type<tc>, window_params = [{transform_indices = @transform_0, window_bounds = array<i64: 8, 32>}, {transform_indices = @transform_1, window_bounds = array<i64: 16, 32>}, {pipeline_mode = #tpu.pipeline_mode<synchronous>, transform_indices = @transform_2, window_bounds = array<i64: 8, 16>}, {pipeline_mode = #tpu.pipeline_mode<synchronous>, transform_indices = @transform_3, window_bounds = array<i64: 32, 96>}, {pipeline_mode = #tpu.pipeline_mode<synchronous>, transform_indices = @transform_4, window_bounds = array<i64: 1, 96>}, {pipeline_mode = #tpu.pipeline_mode<synchronous>, transform_indices = @transform_5, window_bounds = array<i64: 32, 32>}, {pipeline_mode = #tpu.pipeline_mode<synchronous>, transform_indices = @transform_6, window_bounds = array<i64: 1, 32>}, {pipeline_mode = #tpu.pipeline_mode<synchronous>, transform_indices = @transform_7, window_bounds = array<i64: 32, 64>}, {pipeline_mode = #tpu.pipeline_mode<synchronous>, transform_indices = @transform_8, window_bounds = array<i64: 1, 64>}, {pipeline_mode = #tpu.pipeline_mode<synchronous>, transform_indices = @transform_9, window_bounds = array<i64: 64, 32>}, {pipeline_mode = #tpu.pipeline_mode<synchronous>, transform_indices = @transform_10, window_bounds = array<i64: 1, 32>}, {pipeline_mode = #tpu.pipeline_mode<synchronous>, transform_indices = @transform_11, window_bounds = array<i64: 8, 32>}, {transform_indices = @transform_12, window_bounds = array<i64: 8, 32>}, {transform_indices = @transform_13, window_bounds = array<i64: 1, 8, 16>}]} {
    %c0 = arith.constant 0 : index
    %c0_0 = arith.constant 0 : index
    %0 = vector.load %arg12[%c0, %c0_0] : memref<8x32xf32, #tpu.memory_space<vmem>>, vector<8x32xf32>
    %1 = vector.extract_strided_slice %0 {offsets = [0, 0], sizes = [1, 32], strides = [1, 1]} : vector<8x32xf32> to vector<1x32xf32>
    %2 = vector.extract_strided_slice %0 {offsets = [1, 0], sizes = [1, 32], strides = [1, 1]} : vector<8x32xf32> to vector<1x32xf32>
    %3 = vector.extract_strided_slice %0 {offsets = [2, 0], sizes = [1, 32], strides = [1, 1]} : vector<8x32xf32> to vector<1x32xf32>
    %4 = vector.extract_strided_slice %0 {offsets = [3, 0], sizes = [1, 32], strides = [1, 1]} : vector<8x32xf32> to vector<1x32xf32>
    %5 = vector.extract_strided_slice %0 {offsets = [4, 0], sizes = [1, 32], strides = [1, 1]} : vector<8x32xf32> to vector<1x32xf32>
    %6 = vector.extract_strided_slice %0 {offsets = [5, 0], sizes = [1, 32], strides = [1, 1]} : vector<8x32xf32> to vector<1x32xf32>
    %7 = vector.extract_strided_slice %0 {offsets = [6, 0], sizes = [1, 32], strides = [1, 1]} : vector<8x32xf32> to vector<1x32xf32>
    %8 = vector.extract_strided_slice %0 {offsets = [7, 0], sizes = [1, 32], strides = [1, 1]} : vector<8x32xf32> to vector<1x32xf32>
    %c0_1 = arith.constant 0 : index
    %c0_2 = arith.constant 0 : index
    %9 = vector.load %arg1[%c0_1, %c0_2] : memref<8x32xf32, #tpu.memory_space<vmem>>, vector<8x32xf32>
    %cst = arith.constant dense<0.000000e+00> : vector<8xf32>
    %10 = vector.multi_reduction <add>, %9, %cst [1] : vector<8x32xf32> to vector<8xf32>
    %11 = vector.shape_cast %10 : vector<8xf32> to vector<8x1xf32>
    %cst_3 = arith.constant 3.200000e+01 : f32
    %12 = vector.broadcast %cst_3 : f32 to vector<8x1xf32>
    %13 = arith.divf %11, %12 : vector<8x1xf32>
    %14 = vector.broadcast %13 : vector<8x1xf32> to vector<8x32xf32>
    %15 = arith.subf %9, %14 : vector<8x32xf32>
    %16 = arith.mulf %15, %15 : vector<8x32xf32>
    %cst_4 = arith.constant dense<0.000000e+00> : vector<8xf32>
    %17 = vector.multi_reduction <add>, %16, %cst_4 [1] : vector<8x32xf32> to vector<8xf32>
    %18 = vector.shape_cast %17 : vector<8xf32> to vector<8x1xf32>
    %cst_5 = arith.constant 3.200000e+01 : f32
    %19 = vector.broadcast %cst_5 : f32 to vector<8x1xf32>
    %20 = arith.divf %18, %19 : vector<8x1xf32>
    %21 = vector.broadcast %13 : vector<8x1xf32> to vector<8x32xf32>
    %22 = arith.subf %9, %21 : vector<8x32xf32>
    %cst_6 = arith.constant 9.99999974E-6 : f32
    %23 = vector.broadcast %cst_6 : f32 to vector<8x1xf32>
    %24 = arith.addf %20, %23 : vector<8x1xf32>
    %25 = math.rsqrt %24 : vector<8x1xf32>
    %26 = vector.broadcast %25 : vector<8x1xf32> to vector<8x32xf32>
    %27 = arith.mulf %22, %26 : vector<8x32xf32>
    %28 = vector.broadcast %1 : vector<1x32xf32> to vector<8x32xf32>
    %29 = arith.mulf %27, %28 : vector<8x32xf32>
    %30 = vector.broadcast %2 : vector<1x32xf32> to vector<8x32xf32>
    %31 = arith.addf %29, %30 : vector<8x32xf32>
    %c0_7 = arith.constant 0 : index
    %c0_8 = arith.constant 0 : index
    %32 = vector.load %arg2[%c0_7, %c0_8] : memref<16x32xf32, #tpu.memory_space<vmem>>, vector<16x32xf32>
    %cst_9 = arith.constant dense<0.000000e+00> : vector<16xf32>
    %33 = vector.multi_reduction <add>, %32, %cst_9 [1] : vector<16x32xf32> to vector<16xf32>
    %34 = vector.shape_cast %33 : vector<16xf32> to vector<16x1xf32>
    %cst_10 = arith.constant 3.200000e+01 : f32
    %35 = vector.broadcast %cst_10 : f32 to vector<16x1xf32>
    %36 = arith.divf %34, %35 : vector<16x1xf32>
    %37 = vector.broadcast %36 : vector<16x1xf32> to vector<16x32xf32>
    %38 = arith.subf %32, %37 : vector<16x32xf32>
    %39 = arith.mulf %38, %38 : vector<16x32xf32>
    %cst_11 = arith.constant dense<0.000000e+00> : vector<16xf32>
    %40 = vector.multi_reduction <add>, %39, %cst_11 [1] : vector<16x32xf32> to vector<16xf32>
    %41 = vector.shape_cast %40 : vector<16xf32> to vector<16x1xf32>
    %cst_12 = arith.constant 3.200000e+01 : f32
    %42 = vector.broadcast %cst_12 : f32 to vector<16x1xf32>
    %43 = arith.divf %41, %42 : vector<16x1xf32>
    %44 = vector.broadcast %36 : vector<16x1xf32> to vector<16x32xf32>
    %45 = arith.subf %32, %44 : vector<16x32xf32>
    %cst_13 = arith.constant 9.99999974E-6 : f32
    %46 = vector.broadcast %cst_13 : f32 to vector<16x1xf32>
    %47 = arith.addf %43, %46 : vector<16x1xf32>
    %48 = math.rsqrt %47 : vector<16x1xf32>
    %49 = vector.broadcast %48 : vector<16x1xf32> to vector<16x32xf32>
    %50 = arith.mulf %45, %49 : vector<16x32xf32>
    %51 = vector.broadcast %3 : vector<1x32xf32> to vector<16x32xf32>
    %52 = arith.mulf %50, %51 : vector<16x32xf32>
    %53 = vector.broadcast %4 : vector<1x32xf32> to vector<16x32xf32>
    %54 = arith.addf %52, %53 : vector<16x32xf32>
    %c0_14 = arith.constant 0 : index
    %c0_15 = arith.constant 0 : index
    %55 = vector.load %arg4[%c0_14, %c0_15] : memref<32x96xf32, #tpu.memory_space<vmem>>, vector<32x96xf32>
    %c0_16 = arith.constant 0 : index
    %c0_17 = arith.constant 0 : index
    %56 = vector.load %arg5[%c0_16, %c0_17] : memref<1x96xf32, #tpu.memory_space<vmem>>, vector<1x96xf32>
    %57 = vector.extract_strided_slice %55 {offsets = [0, 0], sizes = [32, 32], strides = [1, 1]} : vector<32x96xf32> to vector<32x32xf32>
    %cst_18 = arith.constant dense<0.000000e+00> : vector<8x32xf32>
    %58 = tpu.matmul %31, %57, %cst_18 {dimension_numbers = #tpu.dot_dimension_numbers<[1], [0], [0], [1], [0, 0, 1, 1], [], []>} : vector<8x32xf32>, vector<32x32xf32>, vector<8x32xf32> -> vector<8x32xf32>
    %59 = vector.extract_strided_slice %56 {offsets = [0, 0], sizes = [1, 32], strides = [1, 1]} : vector<1x96xf32> to vector<1x32xf32>
    %60 = vector.broadcast %59 : vector<1x32xf32> to vector<8x32xf32>
    %61 = arith.addf %58, %60 : vector<8x32xf32>
    %62 = vector.extract_strided_slice %55 {offsets = [0, 32], sizes = [32, 32], strides = [1, 1]} : vector<32x96xf32> to vector<32x32xf32>
    %cst_19 = arith.constant dense<0.000000e+00> : vector<16x32xf32>
    %63 = tpu.matmul %54, %62, %cst_19 {dimension_numbers = #tpu.dot_dimension_numbers<[1], [0], [0], [1], [0, 0, 1, 1], [], []>} : vector<16x32xf32>, vector<32x32xf32>, vector<16x32xf32> -> vector<16x32xf32>
    %64 = vector.extract_strided_slice %56 {offsets = [0, 32], sizes = [1, 32], strides = [1, 1]} : vector<1x96xf32> to vector<1x32xf32>
    %65 = vector.broadcast %64 : vector<1x32xf32> to vector<16x32xf32>
    %66 = arith.addf %63, %65 : vector<16x32xf32>
    %67 = vector.extract_strided_slice %55 {offsets = [0, 64], sizes = [32, 32], strides = [1, 1]} : vector<32x96xf32> to vector<32x32xf32>
    %cst_20 = arith.constant dense<0.000000e+00> : vector<16x32xf32>
    %68 = tpu.matmul %54, %67, %cst_20 {dimension_numbers = #tpu.dot_dimension_numbers<[1], [0], [0], [1], [0, 0, 1, 1], [], []>} : vector<16x32xf32>, vector<32x32xf32>, vector<16x32xf32> -> vector<16x32xf32>
    %69 = vector.extract_strided_slice %56 {offsets = [0, 64], sizes = [1, 32], strides = [1, 1]} : vector<1x96xf32> to vector<1x32xf32>
    %70 = vector.broadcast %69 : vector<1x32xf32> to vector<16x32xf32>
    %71 = arith.addf %68, %70 : vector<16x32xf32>
    %cst_21 = arith.constant 0.353553385 : f32
    %72 = vector.broadcast %cst_21 : f32 to vector<8x32xf32>
    %73 = arith.mulf %61, %72 : vector<8x32xf32>
    %c0_22 = arith.constant 0 : index
    %c0_23 = arith.constant 0 : index
    %74 = vector.load %arg3[%c0_22, %c0_23] : memref<8x16xf32, #tpu.memory_space<vmem>>, vector<8x16xf32>
    %cst_24 = arith.constant 0.000000e+00 : f32
    %75 = vector.broadcast %cst_24 : f32 to vector<8x16xf32>
    %76 = vector.extract_strided_slice %73 {offsets = [0, 0], sizes = [8, 8], strides = [1, 1]} : vector<8x32xf32> to vector<8x8xf32>
    %77 = vector.extract_strided_slice %66 {offsets = [0, 0], sizes = [16, 8], strides = [1, 1]} : vector<16x32xf32> to vector<16x8xf32>
    %78 = vector.extract_strided_slice %71 {offsets = [0, 0], sizes = [16, 8], strides = [1, 1]} : vector<16x32xf32> to vector<16x8xf32>
    %cst_25 = arith.constant dense<0.000000e+00> : vector<8x16xf32>
    %79 = tpu.matmul %76, %77, %cst_25 {dimension_numbers = #tpu.dot_dimension_numbers<[1], [1], [0], [0], [0, 0, 1, 0], [], []>} : vector<8x8xf32>, vector<16x8xf32>, vector<8x16xf32> -> vector<8x16xf32>
    %80 = arith.addf %79, %74 : vector<8x16xf32>
    %cst_26 = arith.constant dense<0xFF800000> : vector<8xf32>
    %81 = vector.multi_reduction <maximumf>, %80, %cst_26 [1] : vector<8x16xf32> to vector<8xf32>
    %82 = vector.shape_cast %81 : vector<8xf32> to vector<8x1xf32>
    %83 = vector.broadcast %82 : vector<8x1xf32> to vector<8x16xf32>
    %84 = arith.subf %80, %83 : vector<8x16xf32>
    %85 = math.exp %84 : vector<8x16xf32>
    %cst_27 = arith.constant dense<0.000000e+00> : vector<8xf32>
    %86 = vector.multi_reduction <add>, %85, %cst_27 [1] : vector<8x16xf32> to vector<8xf32>
    %87 = vector.shape_cast %86 : vector<8xf32> to vector<8x1xf32>
    %88 = tpu.reciprocal %87 {approx = true} : vector<8x1xf32> -> vector<8x1xf32>
    %89 = vector.broadcast %88 : vector<8x1xf32> to vector<8x16xf32>
    %90 = arith.mulf %85, %89 : vector<8x16xf32>
    %91 = arith.addf %75, %90 : vector<8x16xf32>
    %cst_28 = arith.constant dense<0.000000e+00> : vector<8x8xf32>
    %92 = tpu.matmul %90, %78, %cst_28 {dimension_numbers = #tpu.dot_dimension_numbers<[1], [0], [0], [1], [0, 0, 1, 1], [], []>} : vector<8x16xf32>, vector<16x8xf32>, vector<8x8xf32> -> vector<8x8xf32>
    %93 = vector.extract_strided_slice %73 {offsets = [0, 8], sizes = [8, 8], strides = [1, 1]} : vector<8x32xf32> to vector<8x8xf32>
    %94 = vector.extract_strided_slice %66 {offsets = [0, 8], sizes = [16, 8], strides = [1, 1]} : vector<16x32xf32> to vector<16x8xf32>
    %95 = vector.extract_strided_slice %71 {offsets = [0, 8], sizes = [16, 8], strides = [1, 1]} : vector<16x32xf32> to vector<16x8xf32>
    %cst_29 = arith.constant dense<0.000000e+00> : vector<8x16xf32>
    %96 = tpu.matmul %93, %94, %cst_29 {dimension_numbers = #tpu.dot_dimension_numbers<[1], [1], [0], [0], [0, 0, 1, 0], [], []>} : vector<8x8xf32>, vector<16x8xf32>, vector<8x16xf32> -> vector<8x16xf32>
    %97 = arith.addf %96, %74 : vector<8x16xf32>
    %cst_30 = arith.constant dense<0xFF800000> : vector<8xf32>
    %98 = vector.multi_reduction <maximumf>, %97, %cst_30 [1] : vector<8x16xf32> to vector<8xf32>
    %99 = vector.shape_cast %98 : vector<8xf32> to vector<8x1xf32>
    %100 = vector.broadcast %99 : vector<8x1xf32> to vector<8x16xf32>
    %101 = arith.subf %97, %100 : vector<8x16xf32>
    %102 = math.exp %101 : vector<8x16xf32>
    %cst_31 = arith.constant dense<0.000000e+00> : vector<8xf32>
    %103 = vector.multi_reduction <add>, %102, %cst_31 [1] : vector<8x16xf32> to vector<8xf32>
    %104 = vector.shape_cast %103 : vector<8xf32> to vector<8x1xf32>
    %105 = tpu.reciprocal %104 {approx = true} : vector<8x1xf32> -> vector<8x1xf32>
    %106 = vector.broadcast %105 : vector<8x1xf32> to vector<8x16xf32>
    %107 = arith.mulf %102, %106 : vector<8x16xf32>
    %108 = arith.addf %91, %107 : vector<8x16xf32>
    %cst_32 = arith.constant dense<0.000000e+00> : vector<8x8xf32>
    %109 = tpu.matmul %107, %95, %cst_32 {dimension_numbers = #tpu.dot_dimension_numbers<[1], [0], [0], [1], [0, 0, 1, 1], [], []>} : vector<8x16xf32>, vector<16x8xf32>, vector<8x8xf32> -> vector<8x8xf32>
    %110 = vector.extract_strided_slice %73 {offsets = [0, 16], sizes = [8, 8], strides = [1, 1]} : vector<8x32xf32> to vector<8x8xf32>
    %111 = vector.extract_strided_slice %66 {offsets = [0, 16], sizes = [16, 8], strides = [1, 1]} : vector<16x32xf32> to vector<16x8xf32>
    %112 = vector.extract_strided_slice %71 {offsets = [0, 16], sizes = [16, 8], strides = [1, 1]} : vector<16x32xf32> to vector<16x8xf32>
    %cst_33 = arith.constant dense<0.000000e+00> : vector<8x16xf32>
    %113 = tpu.matmul %110, %111, %cst_33 {dimension_numbers = #tpu.dot_dimension_numbers<[1], [1], [0], [0], [0, 0, 1, 0], [], []>} : vector<8x8xf32>, vector<16x8xf32>, vector<8x16xf32> -> vector<8x16xf32>
    %114 = arith.addf %113, %74 : vector<8x16xf32>
    %cst_34 = arith.constant dense<0xFF800000> : vector<8xf32>
    %115 = vector.multi_reduction <maximumf>, %114, %cst_34 [1] : vector<8x16xf32> to vector<8xf32>
    %116 = vector.shape_cast %115 : vector<8xf32> to vector<8x1xf32>
    %117 = vector.broadcast %116 : vector<8x1xf32> to vector<8x16xf32>
    %118 = arith.subf %114, %117 : vector<8x16xf32>
    %119 = math.exp %118 : vector<8x16xf32>
    %cst_35 = arith.constant dense<0.000000e+00> : vector<8xf32>
    %120 = vector.multi_reduction <add>, %119, %cst_35 [1] : vector<8x16xf32> to vector<8xf32>
    %121 = vector.shape_cast %120 : vector<8xf32> to vector<8x1xf32>
    %122 = tpu.reciprocal %121 {approx = true} : vector<8x1xf32> -> vector<8x1xf32>
    %123 = vector.broadcast %122 : vector<8x1xf32> to vector<8x16xf32>
    %124 = arith.mulf %119, %123 : vector<8x16xf32>
    %125 = arith.addf %108, %124 : vector<8x16xf32>
    %cst_36 = arith.constant dense<0.000000e+00> : vector<8x8xf32>
    %126 = tpu.matmul %124, %112, %cst_36 {dimension_numbers = #tpu.dot_dimension_numbers<[1], [0], [0], [1], [0, 0, 1, 1], [], []>} : vector<8x16xf32>, vector<16x8xf32>, vector<8x8xf32> -> vector<8x8xf32>
    %127 = vector.extract_strided_slice %73 {offsets = [0, 24], sizes = [8, 8], strides = [1, 1]} : vector<8x32xf32> to vector<8x8xf32>
    %128 = vector.extract_strided_slice %66 {offsets = [0, 24], sizes = [16, 8], strides = [1, 1]} : vector<16x32xf32> to vector<16x8xf32>
    %129 = vector.extract_strided_slice %71 {offsets = [0, 24], sizes = [16, 8], strides = [1, 1]} : vector<16x32xf32> to vector<16x8xf32>
    %cst_37 = arith.constant dense<0.000000e+00> : vector<8x16xf32>
    %130 = tpu.matmul %127, %128, %cst_37 {dimension_numbers = #tpu.dot_dimension_numbers<[1], [1], [0], [0], [0, 0, 1, 0], [], []>} : vector<8x8xf32>, vector<16x8xf32>, vector<8x16xf32> -> vector<8x16xf32>
    %131 = arith.addf %130, %74 : vector<8x16xf32>
    %cst_38 = arith.constant dense<0xFF800000> : vector<8xf32>
    %132 = vector.multi_reduction <maximumf>, %131, %cst_38 [1] : vector<8x16xf32> to vector<8xf32>
    %133 = vector.shape_cast %132 : vector<8xf32> to vector<8x1xf32>
    %134 = vector.broadcast %133 : vector<8x1xf32> to vector<8x16xf32>
    %135 = arith.subf %131, %134 : vector<8x16xf32>
    %136 = math.exp %135 : vector<8x16xf32>
    %cst_39 = arith.constant dense<0.000000e+00> : vector<8xf32>
    %137 = vector.multi_reduction <add>, %136, %cst_39 [1] : vector<8x16xf32> to vector<8xf32>
    %138 = vector.shape_cast %137 : vector<8xf32> to vector<8x1xf32>
    %139 = tpu.reciprocal %138 {approx = true} : vector<8x1xf32> -> vector<8x1xf32>
    %140 = vector.broadcast %139 : vector<8x1xf32> to vector<8x16xf32>
    %141 = arith.mulf %136, %140 : vector<8x16xf32>
    %142 = arith.addf %125, %141 : vector<8x16xf32>
    %cst_40 = arith.constant dense<0.000000e+00> : vector<8x8xf32>
    %143 = tpu.matmul %141, %129, %cst_40 {dimension_numbers = #tpu.dot_dimension_numbers<[1], [0], [0], [1], [0, 0, 1, 1], [], []>} : vector<8x16xf32>, vector<16x8xf32>, vector<8x8xf32> -> vector<8x8xf32>
    %cst_41 = arith.constant 2.500000e-01 : f32
    %144 = vector.broadcast %cst_41 : f32 to vector<8x16xf32>
    %145 = arith.mulf %142, %144 : vector<8x16xf32>
    %c0_42 = arith.constant 0 : index
    %c0_43 = arith.constant 0 : index
    %c0_44 = arith.constant 0 : index
    %146 = vector.load %arg14[%c0_42, %c0_43, %c0_44] : memref<1x8x16xf32, #tpu.memory_space<vmem>>, vector<1x8x16xf32>
    %147 = vector.shape_cast %146 : vector<1x8x16xf32> to vector<8x16xf32>
    %148 = vector.shape_cast %145 : vector<8x16xf32> to vector<1x8x16xf32>
    tpu.vector_store %arg14[%c0_42, %c0_43, %c0_44], %148 {strides = array<i32>} : memref<1x8x16xf32, #tpu.memory_space<vmem>>, vector<1x8x16xf32>,
    %149 = tpu.concatenate %92, %109, %126, %143 in 1 : vector<8x8xf32>, vector<8x8xf32>, vector<8x8xf32>, vector<8x8xf32> -> vector<8x32xf32>
    %c0_45 = arith.constant 0 : index
    %c0_46 = arith.constant 0 : index
    %150 = vector.load %arg6[%c0_45, %c0_46] : memref<32x32xf32, #tpu.memory_space<vmem>>, vector<32x32xf32>
    %cst_47 = arith.constant dense<0.000000e+00> : vector<8x32xf32>
    %151 = tpu.matmul %149, %150, %cst_47 {dimension_numbers = #tpu.dot_dimension_numbers<[1], [0], [0], [1], [0, 0, 1, 1], [], []>} : vector<8x32xf32>, vector<32x32xf32>, vector<8x32xf32> -> vector<8x32xf32>
    %c0_48 = arith.constant 0 : index
    %c0_49 = arith.constant 0 : index
    %152 = vector.load %arg7[%c0_48, %c0_49] : memref<1x32xf32, #tpu.memory_space<vmem>>, vector<1x32xf32>
    %153 = vector.broadcast %152 : vector<1x32xf32> to vector<8x32xf32>
    %154 = arith.addf %151, %153 : vector<8x32xf32>
    %155 = arith.addf %31, %154 : vector<8x32xf32>
    %cst_50 = arith.constant dense<0.000000e+00> : vector<8xf32>
    %156 = vector.multi_reduction <add>, %155, %cst_50 [1] : vector<8x32xf32> to vector<8xf32>
    %157 = vector.shape_cast %156 : vector<8xf32> to vector<8x1xf32>
    %cst_51 = arith.constant 3.200000e+01 : f32
    %158 = vector.broadcast %cst_51 : f32 to vector<8x1xf32>
    %159 = arith.divf %157, %158 : vector<8x1xf32>
    %160 = vector.broadcast %159 : vector<8x1xf32> to vector<8x32xf32>
    %161 = arith.subf %155, %160 : vector<8x32xf32>
    %162 = arith.mulf %161, %161 : vector<8x32xf32>
    %cst_52 = arith.constant dense<0.000000e+00> : vector<8xf32>
    %163 = vector.multi_reduction <add>, %162, %cst_52 [1] : vector<8x32xf32> to vector<8xf32>
    %164 = vector.shape_cast %163 : vector<8xf32> to vector<8x1xf32>
    %cst_53 = arith.constant 3.200000e+01 : f32
    %165 = vector.broadcast %cst_53 : f32 to vector<8x1xf32>
    %166 = arith.divf %164, %165 : vector<8x1xf32>
    %167 = vector.broadcast %159 : vector<8x1xf32> to vector<8x32xf32>
    %168 = arith.subf %155, %167 : vector<8x32xf32>
    %cst_54 = arith.constant 9.99999974E-6 : f32
    %169 = vector.broadcast %cst_54 : f32 to vector<8x1xf32>
    %170 = arith.addf %166, %169 : vector<8x1xf32>
    %171 = math.rsqrt %170 : vector<8x1xf32>
    %172 = vector.broadcast %171 : vector<8x1xf32> to vector<8x32xf32>
    %173 = arith.mulf %168, %172 : vector<8x32xf32>
    %174 = vector.broadcast %5 : vector<1x32xf32> to vector<8x32xf32>
    %175 = arith.mulf %173, %174 : vector<8x32xf32>
    %176 = vector.broadcast %6 : vector<1x32xf32> to vector<8x32xf32>
    %177 = arith.addf %175, %176 : vector<8x32xf32>
    %c0_55 = arith.constant 0 : index
    %c0_56 = arith.constant 0 : index
    %178 = vector.load %arg8[%c0_55, %c0_56] : memref<32x64xf32, #tpu.memory_space<vmem>>, vector<32x64xf32>
    %cst_57 = arith.constant dense<0.000000e+00> : vector<8x64xf32>
    %179 = tpu.matmul %177, %178, %cst_57 {dimension_numbers = #tpu.dot_dimension_numbers<[1], [0], [0], [1], [0, 0, 1, 1], [], []>} : vector<8x32xf32>, vector<32x64xf32>, vector<8x64xf32> -> vector<8x64xf32>
    %c0_58 = arith.constant 0 : index
    %c0_59 = arith.constant 0 : index
    %180 = vector.load %arg9[%c0_58, %c0_59] : memref<1x64xf32, #tpu.memory_space<vmem>>, vector<1x64xf32>
    %181 = vector.broadcast %180 : vector<1x64xf32> to vector<8x64xf32>
    %182 = arith.addf %179, %181 : vector<8x64xf32>
    %cst_60 = arith.constant 0.000000e+00 : f32
    %183 = vector.broadcast %cst_60 : f32 to vector<8x64xf32>
    %184 = arith.maximumf %182, %183 : vector<8x64xf32>
    %c0_61 = arith.constant 0 : index
    %c0_62 = arith.constant 0 : index
    %185 = vector.load %arg10[%c0_61, %c0_62] : memref<64x32xf32, #tpu.memory_space<vmem>>, vector<64x32xf32>
    %cst_63 = arith.constant dense<0.000000e+00> : vector<8x32xf32>
    %186 = tpu.matmul %184, %185, %cst_63 {dimension_numbers = #tpu.dot_dimension_numbers<[1], [0], [0], [1], [0, 0, 1, 1], [], []>} : vector<8x64xf32>, vector<64x32xf32>, vector<8x32xf32> -> vector<8x32xf32>
    %c0_64 = arith.constant 0 : index
    %c0_65 = arith.constant 0 : index
    %187 = vector.load %arg11[%c0_64, %c0_65] : memref<1x32xf32, #tpu.memory_space<vmem>>, vector<1x32xf32>
    %188 = vector.broadcast %187 : vector<1x32xf32> to vector<8x32xf32>
    %189 = arith.addf %186, %188 : vector<8x32xf32>
    %190 = arith.addf %177, %189 : vector<8x32xf32>
    %cst_66 = arith.constant dense<0.000000e+00> : vector<8xf32>
    %191 = vector.multi_reduction <add>, %190, %cst_66 [1] : vector<8x32xf32> to vector<8xf32>
    %192 = vector.shape_cast %191 : vector<8xf32> to vector<8x1xf32>
    %cst_67 = arith.constant 3.200000e+01 : f32
    %193 = vector.broadcast %cst_67 : f32 to vector<8x1xf32>
    %194 = arith.divf %192, %193 : vector<8x1xf32>
    %195 = vector.broadcast %194 : vector<8x1xf32> to vector<8x32xf32>
    %196 = arith.subf %190, %195 : vector<8x32xf32>
    %197 = arith.mulf %196, %196 : vector<8x32xf32>
    %cst_68 = arith.constant dense<0.000000e+00> : vector<8xf32>
    %198 = vector.multi_reduction <add>, %197, %cst_68 [1] : vector<8x32xf32> to vector<8xf32>
    %199 = vector.shape_cast %198 : vector<8xf32> to vector<8x1xf32>
    %cst_69 = arith.constant 3.200000e+01 : f32
    %200 = vector.broadcast %cst_69 : f32 to vector<8x1xf32>
    %201 = arith.divf %199, %200 : vector<8x1xf32>
    %202 = vector.broadcast %194 : vector<8x1xf32> to vector<8x32xf32>
    %203 = arith.subf %190, %202 : vector<8x32xf32>
    %cst_70 = arith.constant 9.99999974E-6 : f32
    %204 = vector.broadcast %cst_70 : f32 to vector<8x1xf32>
    %205 = arith.addf %201, %204 : vector<8x1xf32>
    %206 = math.rsqrt %205 : vector<8x1xf32>
    %207 = vector.broadcast %206 : vector<8x1xf32> to vector<8x32xf32>
    %208 = arith.mulf %203, %207 : vector<8x32xf32>
    %209 = vector.broadcast %7 : vector<1x32xf32> to vector<8x32xf32>
    %210 = arith.mulf %208, %209 : vector<8x32xf32>
    %211 = vector.broadcast %8 : vector<1x32xf32> to vector<8x32xf32>
    %212 = arith.addf %210, %211 : vector<8x32xf32>
    %c0_71 = arith.constant 0 : index
    %c0_72 = arith.constant 0 : index
    %213 = vector.load %arg13[%c0_71, %c0_72] : memref<8x32xf32, #tpu.memory_space<vmem>>, vector<8x32xf32>
    tpu.vector_store %arg13[%c0_71, %c0_72], %212 {strides = array<i32>} : memref<8x32xf32, #tpu.memory_space<vmem>>, vector<8x32xf32>,
    return
  }
  func.func @transform_0(%arg0: i32) -> (i32, i32) {
    %c0_i32 = arith.constant 0 : i32
    %c0_i32_0 = arith.constant 0 : i32
    return %arg0, %c0_i32 : i32, i32
  }
  func.func @transform_1(%arg0: i32) -> (i32, i32) {
    %c0_i32 = arith.constant 0 : i32
    %c0_i32_0 = arith.constant 0 : i32
    return %arg0, %c0_i32 : i32, i32
  }
  func.func @transform_2(%arg0: i32) -> (i32, i32) {
    %c0_i32 = arith.constant 0 : i32
    %c0_i32_0 = arith.constant 0 : i32
    %c0_i32_1 = arith.constant 0 : i32
    return %c0_i32, %c0_i32_0 : i32, i32
  }
  func.func @transform_3(%arg0: i32) -> (i32, i32) {
    %c0_i32 = arith.constant 0 : i32
    %c0_i32_0 = arith.constant 0 : i32
    %c0_i32_1 = arith.constant 0 : i32
    return %c0_i32, %c0_i32_0 : i32, i32
  }
  func.func @transform_4(%arg0: i32) -> (i32, i32) {
    %c0_i32 = arith.constant 0 : i32
    %c0_i32_0 = arith.constant 0 : i32
    %c0_i32_1 = arith.constant 0 : i32
    return %c0_i32, %c0_i32_0 : i32, i32
  }
  func.func @transform_5(%arg0: i32) -> (i32, i32) {
    %c0_i32 = arith.constant 0 : i32
    %c0_i32_0 = arith.constant 0 : i32
    %c0_i32_1 = arith.constant 0 : i32
    return %c0_i32, %c0_i32_0 : i32, i32
  }
  func.func @transform_6(%arg0: i32) -> (i32, i32) {
    %c0_i32 = arith.constant 0 : i32
    %c0_i32_0 = arith.constant 0 : i32
    %c0_i32_1 = arith.constant 0 : i32
    return %c0_i32, %c0_i32_0 : i32, i32
  }
  func.func @transform_7(%arg0: i32) -> (i32, i32) {
    %c0_i32 = arith.constant 0 : i32
    %c0_i32_0 = arith.constant 0 : i32
    %c0_i32_1 = arith.constant 0 : i32
    return %c0_i32, %c0_i32_0 : i32, i32
  }
  func.func @transform_8(%arg0: i32) -> (i32, i32) {
    %c0_i32 = arith.constant 0 : i32
    %c0_i32_0 = arith.constant 0 : i32
    %c0_i32_1 = arith.constant 0 : i32
    return %c0_i32, %c0_i32_0 : i32, i32
  }
  func.func @transform_9(%arg0: i32) -> (i32, i32) {
    %c0_i32 = arith.constant 0 : i32
    %c0_i32_0 = arith.constant 0 : i32
    %c0_i32_1 = arith.constant 0 : i32
    return %c0_i32, %c0_i32_0 : i32, i32
  }
  func.func @transform_10(%arg0: i32) -> (i32, i32) {
    %c0_i32 = arith.constant 0 : i32
    %c0_i32_0 = arith.constant 0 : i32
    %c0_i32_1 = arith.constant 0 : i32
    return %c0_i32, %c0_i32_0 : i32, i32
  }
  func.func @transform_11(%arg0: i32) -> (i32, i32) {
    %c0_i32 = arith.constant 0 : i32
    %c0_i32_0 = arith.constant 0 : i32
    %c0_i32_1 = arith.constant 0 : i32
    return %c0_i32, %c0_i32_0 : i32, i32
  }
  func.func @transform_12(%arg0: i32) -> (i32, i32) {
    %c0_i32 = arith.constant 0 : i32
    %c0_i32_0 = arith.constant 0 : i32
    return %arg0, %c0_i32 : i32, i32
  }
  func.func @transform_13(%arg0: i32) -> (i32, i32, i32) {
    %c0_i32 = arith.constant 0 : i32
    %c0_i32_0 = arith.constant 0 : i32
    %c0_i32_1 = arith.constant 0 : i32
    return %arg0, %c0_i32, %c0_i32_0 : i32, i32, i32
  }
}

</mosaic_0001>

<llo_original>
// kernel: frame_layer_forward.1
$region0: #{frame_layer_forward.1}
  #allocation0 [shape = 'u32[]', space=smem, size = 0x4, offset = 0x4, fixed_abs, tag = 'smem constant byte address 0x4 - core index']
  #allocation1 [shape = 'u32[144,128]{1,0:T(1,128)}', space=vmem, size = 0x12000, scoped, tag = 'internal scratch']
  %s0 = inlined_call_operand.vmem [shape: f32[16,32], index: 0, kind: input, shape index: {}]
  %s1 = inlined_call_operand.vmem [shape: f32[32,32], index: 1, kind: input, shape index: {}]
  %s2 = inlined_call_operand.vmem [shape: f32[8,16], index: 2, kind: input, shape index: {}]
  %s3 = inlined_call_operand.vmem [shape: f32[32,96], index: 3, kind: input, shape index: {}]
  %s4 = inlined_call_operand.vmem [shape: f32[1,96], index: 4, kind: input, shape index: {}]
  %s5 = inlined_call_operand.vmem [shape: f32[32,32], index: 5, kind: input, shape index: {}]
  %s6 = inlined_call_operand.vmem [shape: f32[1,32], index: 6, kind: input, shape index: {}]
  %s7 = inlined_call_operand.vmem [shape: f32[32,64], index: 7, kind: input, shape index: {}]
  %s8 = inlined_call_operand.vmem [shape: f32[1,64], index: 8, kind: input, shape index: {}]
  %s9 = inlined_call_operand.vmem [shape: f32[64,32], index: 9, kind: input, shape index: {}]
  %s10 = inlined_call_operand.vmem [shape: f32[1,32], index: 10, kind: input, shape index: {}]
  %s11 = inlined_call_operand.vmem [shape: f32[8,32], index: 11, kind: input, shape index: {}]
  %s12 = inlined_call_operand.vmem [shape: f32[16,32], index: 12, kind: output, shape index: {0}]
  %s13 = inlined_call_operand.hbm [shape: f32[2,8,16], index: 13, kind: output, shape index: {1}]
  %14 = xla_tuple %s12, %s13
  %s15 = sld [smem:[#allocation0]]
  $region89: #{frame_layer_forward.1} parent=0
    _
  %s17 = ssub.s32 1, %s15
  %s18 = scalar_select 0, %s17, %s15
  $region1: #{frame_layer_forward.1} parent=0
    #allocation2 [shape = 'u8[8192]{0}', space=vmem, size = 0x2000, scoped, tag = 'output window, operand 1']
    #allocation3 [shape = 's32[2]{0}', space=sflag, size = 0x8, scoped, tag = 'scoped memory for frame_layer_forward.1']
    %19 = vsyncpa [#allocation3], 0
    %s20 = scalar_lea.sflag [#allocation3], 1
    %21 = vsyncpa %s20, 0
    loop: start=0, step=1, limit=4
    $region2: #{frame_layer_forward.1} parent=1 // loop_pre_header
      _
    $region3: #{frame_layer_forward.1} parent=1 // loop_header
      %s23 = sphi 0, %s27
      %p24 = scmp.ge.s32.totalorder %s23, 4
      %s33 = sphi 0, %s35
      %s36 = sphi 0, %s33
      %s37 = sphi 0, %s36
      %s53 = sphi 0, %s37
      %s59 = sphi 0, %s61
      %s62 = sphi 0, %s59
      %s63 = sphi 0, %s62
      %s79 = sphi 0, %s63
      %s83 = sphi 0, %s83
      %s85 = sphi 0, %s83
      %s86 = sphi 0, %s85
      %s100 = sphi 0, %s86
      %s104 = sphi 0, %s104
      %s106 = sphi 0, %s104
      %s107 = sphi 0, %s106
      %s121 = sphi 0, %s107
      %s125 = sphi 0, %s125
      %s127 = sphi 0, %s125
      %s128 = sphi 0, %s127
      %s142 = sphi 0, %s128
      %s146 = sphi 0, %s146
      %s148 = sphi 0, %s146
      %s149 = sphi 0, %s148
      %s163 = sphi 0, %s149
      %s167 = sphi 0, %s167
      %s169 = sphi 0, %s167
      %s170 = sphi 0, %s169
      %s184 = sphi 0, %s170
      %s188 = sphi 0, %s188
      %s190 = sphi 0, %s188
      %s191 = sphi 0, %s190
      %s205 = sphi 0, %s191
      %s209 = sphi 0, %s209
      %s211 = sphi 0, %s209
      %s212 = sphi 0, %s211
      %s226 = sphi 0, %s212
      %s230 = sphi 0, %s230
      %s232 = sphi 0, %s230
      %s233 = sphi 0, %s232
      %s247 = sphi 0, %s233
      %s251 = sphi 0, %s251
      %s253 = sphi 0, %s251
      %s254 = sphi 0, %s253
      %s268 = sphi 0, %s254
      %s272 = sphi 0, %s272
      %s274 = sphi 0, %s272
      %s275 = sphi 0, %s274
      %s289 = sphi 0, %s275
      %s295 = sphi 0, %s297
      %s298 = sphi 0, %s295
      %s299 = sphi 0, %s298
      %s315 = sphi 0, %s299
      %s321 = sphi 0, %s323
      %s324 = sphi 0, %s321
      %s325 = sphi 0, %s324
      %s341 = sphi 0, %s325
    $region4: #{frame_layer_forward.1} parent=1 // loop_header_branch
      %26 = sbr.rel (%p24) target = $region8
    $region5: #{frame_layer_forward.1} parent=1 // loop_body
      %s28 = ssub.s32 %s23, 1
      %s29 = ssub.s32 %s23, 2
      %s30 = sadd.s32 %s23, 1
      %s31 = ssub.s32 %s23, %s30
      %p32 = scmp.eq.s32.totalorder %s31, 0
      %s34 = sadd.s32 %s33, 1
      %s35 = scalar_select %p32, %s33, %s34
      %p38 = pneg %p32
      %p39 = scmp.eq.s32.totalorder %s23, 1
      %p40 = por %p38, %p39
      %p41 = scmp.ne.s32.totalorder %s33, %s36
      %p42 = scmp.eq.s32.totalorder %s23, 0
      %p43 = por %p41, %p42
      %p44 = scmp.ne.s32.totalorder %s33, %s36
      %p45 = scmp.eq.s32.totalorder %s28, 1
      %p46 = por %p44, %p45
      %p47 = scmp.ne.s32.totalorder %s36, %s37
      %p48 = scmp.eq.s32.totalorder %s28, 0
      %p49 = por %p47, %p48
      %p50 = scmp.ne.s32.totalorder %s36, %s37
      %p51 = scmp.eq.s32.totalorder %s29, 1
      %p52 = por %p50, %p51
      %p54 = scmp.ne.s32.totalorder %s37, %s53
      %p55 = scmp.eq.s32.totalorder %s29, 0
      %p56 = por %p54, %p55
      %s57 = ssub.s32 %s23, %s30
      %p58 = scmp.eq.s32.totalorder %s57, 0
      %s60 = sadd.s32 %s59, 1
      %s61 = scalar_select %p58, %s59, %s60
      %p64 = pneg %p58
      %p65 = scmp.eq.s32.totalorder %s23, 1
      %p66 = por %p64, %p65
      %p67 = scmp.ne.s32.totalorder %s59, %s62
      %p68 = scmp.eq.s32.totalorder %s23, 0
      %p69 = por %p67, %p68
      %p70 = scmp.ne.s32.totalorder %s59, %s62
      %p71 = scmp.eq.s32.totalorder %s28, 1
      %p72 = por %p70, %p71
      %p73 = scmp.ne.s32.totalorder %s62, %s63
      %p74 = scmp.eq.s32.totalorder %s28, 0
      %p75 = por %p73, %p74
      %p76 = scmp.ne.s32.totalorder %s62, %s63
      %p77 = scmp.eq.s32.totalorder %s29, 1
      %p78 = por %p76, %p77
      %p80 = scmp.ne.s32.totalorder %s63, %s79
      %p81 = scmp.eq.s32.totalorder %s29, 0
      %p82 = por %p80, %p81
      %s84 = sadd.s32 %s83, 1
      %p87 = scmp.eq.s32.totalorder %s23, 1
      %p88 = scmp.ne.s32.totalorder %s83, %s85
      %p89 = scmp.eq.s32.totalorder %s23, 0
      %p90 = por %p88, %p89
      %p91 = scmp.ne.s32.totalorder %s83, %s85
      %p92 = scmp.eq.s32.totalorder %s28, 1
      %p93 = por %p91, %p92
      %p94 = scmp.ne.s32.totalorder %s85, %s86
      %p95 = scmp.eq.s32.totalorder %s28, 0
      %p96 = por %p94, %p95
      %p97 = scmp.ne.s32.totalorder %s85, %s86
      %p98 = scmp.eq.s32.totalorder %s29, 1
      %p99 = por %p97, %p98
      %p101 = scmp.ne.s32.totalorder %s86, %s100
      %p102 = scmp.eq.s32.totalorder %s29, 0
      %p103 = por %p101, %p102
      %s105 = sadd.s32 %s104, 1
      %p108 = scmp.eq.s32.totalorder %s23, 1
      %p109 = scmp.ne.s32.totalorder %s104, %s106
      %p110 = scmp.eq.s32.totalorder %s23, 0
      %p111 = por %p109, %p110
      %p112 = scmp.ne.s32.totalorder %s104, %s106
      %p113 = scmp.eq.s32.totalorder %s28, 1
      %p114 = por %p112, %p113
      %p115 = scmp.ne.s32.totalorder %s106, %s107
      %p116 = scmp.eq.s32.totalorder %s28, 0
      %p117 = por %p115, %p116
      %p118 = scmp.ne.s32.totalorder %s106, %s107
      %p119 = scmp.eq.s32.totalorder %s29, 1
      %p120 = por %p118, %p119
      %p122 = scmp.ne.s32.totalorder %s107, %s121
      %p123 = scmp.eq.s32.totalorder %s29, 0
      %p124 = por %p122, %p123
      %s126 = sadd.s32 %s125, 1
      %p129 = scmp.eq.s32.totalorder %s23, 1
      %p130 = scmp.ne.s32.totalorder %s125, %s127
      %p131 = scmp.eq.s32.totalorder %s23, 0
      %p132 = por %p130, %p131
      %p133 = scmp.ne.s32.totalorder %s125, %s127
      %p134 = scmp.eq.s32.totalorder %s28, 1
      %p135 = por %p133, %p134
      %p136 = scmp.ne.s32.totalorder %s127, %s128
      %p137 = scmp.eq.s32.totalorder %s28, 0
      %p138 = por %p136, %p137
      %p139 = scmp.ne.s32.totalorder %s127, %s128
      %p140 = scmp.eq.s32.totalorder %s29, 1
      %p141 = por %p139, %p140
      %p143 = scmp.ne.s32.totalorder %s128, %s142
      %p144 = scmp.eq.s32.totalorder %s29, 0
      %p145 = por %p143, %p144
      %s147 = sadd.s32 %s146, 1
      %p150 = scmp.eq.s32.totalorder %s23, 1
      %p151 = scmp.ne.s32.totalorder %s146, %s148
      %p152 = scmp.eq.s32.totalorder %s23, 0
      %p153 = por %p151, %p152
      %p154 = scmp.ne.s32.totalorder %s146, %s148
      %p155 = scmp.eq.s32.totalorder %s28, 1
      %p156 = por %p154, %p155
      %p157 = scmp.ne.s32.totalorder %s148, %s149
      %p158 = scmp.eq.s32.totalorder %s28, 0
      %p159 = por %p157, %p158
      %p160 = scmp.ne.s32.totalorder %s148, %s149
      %p161 = scmp.eq.s32.totalorder %s29, 1
      %p162 = por %p160, %p161
      %p164 = scmp.ne.s32.totalorder %s149, %s163
      %p165 = scmp.eq.s32.totalorder %s29, 0
      %p166 = por %p164, %p165
      %s168 = sadd.s32 %s167, 1
      %p171 = scmp.eq.s32.totalorder %s23, 1
      %p172 = scmp.ne.s32.totalorder %s167, %s169
      %p173 = scmp.eq.s32.totalorder %s23, 0
      %p174 = por %p172, %p173
      %p175 = scmp.ne.s32.totalorder %s167, %s169
      %p176 = scmp.eq.s32.totalorder %s28, 1
      %p177 = por %p175, %p176
      %p178 = scmp.ne.s32.totalorder %s169, %s170
      %p179 = scmp.eq.s32.totalorder %s28, 0
      %p180 = por %p178, %p179
      %p181 = scmp.ne.s32.totalorder %s169, %s170
      %p182 = scmp.eq.s32.totalorder %s29, 1
      %p183 = por %p181, %p182
      %p185 = scmp.ne.s32.totalorder %s170, %s184
      %p186 = scmp.eq.s32.totalorder %s29, 0
      %p187 = por %p185, %p186
      %s189 = sadd.s32 %s188, 1
      %p192 = scmp.eq.s32.totalorder %s23, 1
      %p193 = scmp.ne.s32.totalorder %s188, %s190
      %p194 = scmp.eq.s32.totalorder %s23, 0
      %p195 = por %p193, %p194
      %p196 = scmp.ne.s32.totalorder %s188, %s190
      %p197 = scmp.eq.s32.totalorder %s28, 1
      %p198 = por %p196, %p197
      %p199 = scmp.ne.s32.totalorder %s190, %s191
      %p200 = scmp.eq.s32.totalorder %s28, 0
      %p201 = por %p199, %p200
      %p202 = scmp.ne.s32.totalorder %s190, %s191
      %p203 = scmp.eq.s32.totalorder %s29, 1
      %p204 = por %p202, %p203
      %p206 = scmp.ne.s32.totalorder %s191, %s205
      %p207 = scmp.eq.s32.totalorder %s29, 0
      %p208 = por %p206, %p207
      %s210 = sadd.s32 %s209, 1
      %p213 = scmp.eq.s32.totalorder %s23, 1
      %p214 = scmp.ne.s32.totalorder %s209, %s211
      %p215 = scmp.eq.s32.totalorder %s23, 0
      %p216 = por %p214, %p215
      %p217 = scmp.ne.s32.totalorder %s209, %s211
      %p218 = scmp.eq.s32.totalorder %s28, 1
      %p219 = por %p217, %p218
      %p220 = scmp.ne.s32.totalorder %s211, %s212
      %p221 = scmp.eq.s32.totalorder %s28, 0
      %p222 = por %p220, %p221
      %p223 = scmp.ne.s32.totalorder %s211, %s212
      %p224 = scmp.eq.s32.totalorder %s29, 1
      %p225 = por %p223, %p224
      %p227 = scmp.ne.s32.totalorder %s212, %s226
      %p228 = scmp.eq.s32.totalorder %s29, 0
      %p229 = por %p227, %p228
      %s231 = sadd.s32 %s230, 1
      %p234 = scmp.eq.s32.totalorder %s23, 1
      %p235 = scmp.ne.s32.totalorder %s230, %s232
      %p236 = scmp.eq.s32.totalorder %s23, 0
      %p237 = por %p235, %p236
      %p238 = scmp.ne.s32.totalorder %s230, %s232
      %p239 = scmp.eq.s32.totalorder %s28, 1
      %p240 = por %p238, %p239
      %p241 = scmp.ne.s32.totalorder %s232, %s233
      %p242 = scmp.eq.s32.totalorder %s28, 0
      %p243 = por %p241, %p242
      %p244 = scmp.ne.s32.totalorder %s232, %s233
      %p245 = scmp.eq.s32.totalorder %s29, 1
      %p246 = por %p244, %p245
      %p248 = scmp.ne.s32.totalorder %s233, %s247
      %p249 = scmp.eq.s32.totalorder %s29, 0
      %p250 = por %p248, %p249
      %s252 = sadd.s32 %s251, 1
      %p255 = scmp.eq.s32.totalorder %s23, 1
      %p256 = scmp.ne.s32.totalorder %s251, %s253
      %p257 = scmp.eq.s32.totalorder %s23, 0
      %p258 = por %p256, %p257
      %p259 = scmp.ne.s32.totalorder %s251, %s253
      %p260 = scmp.eq.s32.totalorder %s28, 1
      %p261 = por %p259, %p260
      %p262 = scmp.ne.s32.totalorder %s253, %s254
      %p263 = scmp.eq.s32.totalorder %s28, 0
      %p264 = por %p262, %p263
      %p265 = scmp.ne.s32.totalorder %s253, %s254
      %p266 = scmp.eq.s32.totalorder %s29, 1
      %p267 = por %p265, %p266
      %p269 = scmp.ne.s32.totalorder %s254, %s268
      %p270 = scmp.eq.s32.totalorder %s29, 0
      %p271 = por %p269, %p270
      %s273 = sadd.s32 %s272, 1
      %p276 = scmp.eq.s32.totalorder %s23, 1
      %p277 = scmp.ne.s32.totalorder %s272, %s274
      %p278 = scmp.eq.s32.totalorder %s23, 0
      %p279 = por %p277, %p278
      %p280 = scmp.ne.s32.totalorder %s272, %s274
      %p281 = scmp.eq.s32.totalorder %s28, 1
      %p282 = por %p280, %p281
      %p283 = scmp.ne.s32.totalorder %s274, %s275
      %p284 = scmp.eq.s32.totalorder %s28, 0
      %p285 = por %p283, %p284
      %p286 = scmp.ne.s32.totalorder %s274, %s275
      %p287 = scmp.eq.s32.totalorder %s29, 1
      %p288 = por %p286, %p287
      %p290 = scmp.ne.s32.totalorder %s275, %s289
      %p291 = scmp.eq.s32.totalorder %s29, 0
      %p292 = por %p290, %p291
      %s293 = ssub.s32 %s23, %s30
      %p294 = scmp.eq.s32.totalorder %s293, 0
      %s296 = sadd.s32 %s295, 1
      %s297 = scalar_select %p294, %s295, %s296
      %p300 = pneg %p294
      %p301 = scmp.eq.s32.totalorder %s23, 1
      %p302 = por %p300, %p301
      %p303 = scmp.ne.s32.totalorder %s295, %s298
      %p304 = scmp.eq.s32.totalorder %s23, 0
      %p305 = por %p303, %p304
      %p306 = scmp.ne.s32.totalorder %s295, %s298
      %p307 = scmp.eq.s32.totalorder %s28, 1
      %p308 = por %p306, %p307
      %p309 = scmp.ne.s32.totalorder %s298, %s299
      %p310 = scmp.eq.s32.totalorder %s28, 0
      %p311 = por %p309, %p310
      %p312 = scmp.ne.s32.totalorder %s298, %s299
      %p313 = scmp.eq.s32.totalorder %s29, 1
      %p314 = por %p312, %p313
      %p316 = scmp.ne.s32.totalorder %s299, %s315
      %p317 = scmp.eq.s32.totalorder %s29, 0
      %p318 = por %p316, %p317
      %s319 = ssub.s32 %s23, %s30
      %p320 = scmp.eq.s32.totalorder %s319, 0
      %s322 = sadd.s32 %s321, 1
      %s323 = scalar_select %p320, %s321, %s322
      %p326 = pneg %p320
      %p327 = scmp.eq.s32.totalorder %s23, 1
      %p328 = por %p326, %p327
      %p329 = scmp.ne.s32.totalorder %s321, %s324
      %p330 = scmp.eq.s32.totalorder %s23, 0
      %p331 = por %p329, %p330
      %p332 = scmp.ne.s32.totalorder %s321, %s324
      %p333 = scmp.eq.s32.totalorder %s28, 1
      %p334 = por %p332, %p333
      %p335 = scmp.ne.s32.totalorder %s324, %s325
      %p336 = scmp.eq.s32.totalorder %s28, 0
      %p337 = por %p335, %p336
      %p338 = scmp.ne.s32.totalorder %s324, %s325
      %p339 = scmp.eq.s32.totalorder %s29, 1
      %p340 = por %p338, %p339
      %p342 = scmp.ne.s32.totalorder %s325, %s341
      %p343 = scmp.eq.s32.totalorder %s29, 0
      %p344 = por %p342, %p343
      %p345 = scmp.le.s32.totalorder 1, %s23
      %p346 = scmp.lt.s32.totalorder %s23, 3
      %p347 = pnand %p345, %p346
      %p348 = pneg %p347
      // Predicated region
      $region9: #{frame_layer_forward.1} parent=5 // pred_check
        _
      $region10: #{frame_layer_forward.1} parent=5 // pred_check_branch
        %350 = sbr.rel (%p347) target = $region12
      $region11: #{frame_layer_forward.1} parent=5 // pred_region
        %s351 = ssub.s32 %s23, 1
        // Predicated region
        $region13: #{frame_layer_forward.1} parent=11 // pred_check
          %p352 = pneg %p96
        $region14: #{frame_layer_forward.1} parent=11 // pred_check_branch
          %354 = sbr.rel (%p352) target = $region16
        $region15: #{frame_layer_forward.1} parent=11 // pred_region
          _
        $region16: #{frame_layer_forward.1} parent=11 // pred_fallthru
          _
        // Predicated region
        $region17: #{frame_layer_forward.1} parent=11 // pred_check
          %p355 = pneg %p117
        $region18: #{frame_layer_forward.1} parent=11 // pred_check_branch
          %357 = sbr.rel (%p355) target = $region20
        $region19: #{frame_layer_forward.1} parent=11 // pred_region
          _
        $region20: #{frame_layer_forward.1} parent=11 // pred_fallthru
          _
        // Predicated region
        $region21: #{frame_layer_forward.1} parent=11 // pred_check
          %p358 = pneg %p138
        $region22: #{frame_layer_forward.1} parent=11 // pred_check_branch
          %360 = sbr.rel (%p358) target = $region24
        $region23: #{frame_layer_forward.1} parent=11 // pred_region
          _
        $region24: #{frame_layer_forward.1} parent=11 // pred_fallthru
          _
        // Predicated region
        $region25: #{frame_layer_forward.1} parent=11 // pred_check
          %p361 = pneg %p159
        $region26: #{frame_layer_forward.1} parent=11 // pred_check_branch
          %363 = sbr.rel (%p361) target = $region28
        $region27: #{frame_layer_forward.1} parent=11 // pred_region
          _
        $region28: #{frame_layer_forward.1} parent=11 // pred_fallthru
          _
        // Predicated region
        $region29: #{frame_layer_forward.1} parent=11 // pred_check
          %p364 = pneg %p180
        $region30: #{frame_layer_forward.1} parent=11 // pred_check_branch
          %366 = sbr.rel (%p364) target = $region32
        $region31: #{frame_layer_forward.1} parent=11 // pred_region
          _
        $region32: #{frame_layer_forward.1} parent=11 // pred_fallthru
          _
        // Predicated region
        $region33: #{frame_layer_forward.1} parent=11 // pred_check
          %p367 = pneg %p201
        $region34: #{frame_layer_forward.1} parent=11 // pred_check_branch
          %369 = sbr.rel (%p367) target = $region36
        $region35: #{frame_layer_forward.1} parent=11 // pred_region
          _
        $region36: #{frame_layer_forward.1} parent=11 // pred_fallthru
          _
        // Predicated region
        $region37: #{frame_layer_forward.1} parent=11 // pred_check
          %p370 = pneg %p222
        $region38: #{frame_layer_forward.1} parent=11 // pred_check_branch
          %372 = sbr.rel (%p370) target = $region40
        $region39: #{frame_layer_forward.1} parent=11 // pred_region
          _
        $region40: #{frame_layer_forward.1} parent=11 // pred_fallthru
          _
        // Predicated region
        $region41: #{frame_layer_forward.1} parent=11 // pred_check
          %p373 = pneg %p243
        $region42: #{frame_layer_forward.1} parent=11 // pred_check_branch
          %375 = sbr.rel (%p373) target = $region44
        $region43: #{frame_layer_forward.1} parent=11 // pred_region
          _
        $region44: #{frame_layer_forward.1} parent=11 // pred_fallthru
          _
        // Predicated region
        $region45: #{frame_layer_forward.1} parent=11 // pred_check
          %p376 = pneg %p264
        $region46: #{frame_layer_forward.1} parent=11 // pred_check_branch
          %378 = sbr.rel (%p376) target = $region48
        $region47: #{frame_layer_forward.1} parent=11 // pred_region
          _
        $region48: #{frame_layer_forward.1} parent=11 // pred_fallthru
          _
        // Predicated region
        $region49: #{frame_layer_forward.1} parent=11 // pred_check
          %p379 = pneg %p285
        $region50: #{frame_layer_forward.1} parent=11 // pred_check_branch
          %381 = sbr.rel (%p379) target = $region52
        $region51: #{frame_layer_forward.1} parent=11 // pred_region
          _
        $region52: #{frame_layer_forward.1} parent=11 // pred_fallthru
          _
      $region12: #{frame_layer_forward.1} parent=5 // pred_fallthru
        _
      %p382 = scmp.lt.s32.totalorder %s23, 2
      // Predicated region
      $region53: #{frame_layer_forward.1} parent=5 // pred_check
        %p383 = pneg %p382
      $region54: #{frame_layer_forward.1} parent=5 // pred_check_branch
        %385 = sbr.rel (%p383) target = $region56
      $region55: #{frame_layer_forward.1} parent=5 // pred_region
        // Predicated region
        $region57: #{frame_layer_forward.1} parent=55 // pred_check
          %p386 = pneg %p43
        $region58: #{frame_layer_forward.1} parent=55 // pred_check_branch
          %388 = sbr.rel (%p386) target = $region60
        $region59: #{frame_layer_forward.1} parent=55 // pred_region
          %p389 = scmp.lt.s32.totalorder %s23, 1
          %s390 = scalar_select %p389, %s23, 1
          %s391 = smul.addr %s390, 8
          %s392 = scalar_lea.vmem %s0, %s391
        $region60: #{frame_layer_forward.1} parent=55 // pred_fallthru
          _
        // Predicated region
        $region61: #{frame_layer_forward.1} parent=55 // pred_check
          %p393 = pneg %p69
        $region62: #{frame_layer_forward.1} parent=55 // pred_check_branch
          %395 = sbr.rel (%p393) target = $region64
        $region63: #{frame_layer_forward.1} parent=55 // pred_region
          %s396 = smul.u32 2, %s23
          %p397 = scmp.lt.s32.totalorder %s396, 3
          %s398 = scalar_select %p397, %s396, 3
          %s399 = smul.addr %s398, 8
          %s400 = scalar_lea.vmem %s1, %s399
          %s401 = smul.u32 2, %s23
        $region64: #{frame_layer_forward.1} parent=55 // pred_fallthru
          _
      $region56: #{frame_layer_forward.1} parent=5 // pred_fallthru
        _
      %p402 = scmp.le.s32.totalorder 1, %s23
      %p403 = scmp.lt.s32.totalorder %s23, 3
      %p404 = pnand %p402, %p403
      %p405 = pneg %p404
      // Predicated region
      $region65: #{frame_layer_forward.1} parent=5 // pred_check
        _
      $region66: #{frame_layer_forward.1} parent=5 // pred_check_branch
        %407 = sbr.rel (%p404) target = $region68
      $region67: #{frame_layer_forward.1} parent=5 // pred_region
        %s408 = ssub.s32 %s23, 1
        %p409 = scmp.lt.s32.totalorder %s28, 1
        %s410 = scalar_select %p409, %s28, 1
        %s411 = smul.addr %s410, 8
        %s412 = scalar_lea.vmem %s0, %s411
        %p413 = pneg %p49
        %p414 = pneg %p46
        %s415 = smul.u32 2, %s28
        %p416 = scmp.lt.s32.totalorder %s415, 3
        %s417 = scalar_select %p416, %s415, 3
        %s418 = smul.addr %s417, 8
        %s419 = scalar_lea.vmem %s1, %s418
        %p420 = pneg %p75
        %p421 = pneg %p72
        %p422 = pneg %p96
        %p423 = pneg %p93
        %p424 = pneg %p117
        %p425 = pneg %p114
        %p426 = pneg %p138
        %p427 = pneg %p135
        %p428 = pneg %p159
        %p429 = pneg %p156
        %p430 = pneg %p180
        %p431 = pneg %p177
        %p432 = pneg %p201
        %p433 = pneg %p198
        %p434 = pneg %p222
        %p435 = pneg %p219
        %p436 = pneg %p243
        %p437 = pneg %p240
        %p438 = pneg %p264
        %p439 = pneg %p261
        %p440 = pneg %p285
        %p441 = pneg %p282
        %p442 = pneg %p311
        %p443 = pneg %p308
        %p444 = scmp.lt.s32.totalorder %s28, 1
        %s445 = scalar_select %p444, %s28, 1
        %s446 = smul.addr %s445, 8
        %s447 = scalar_lea.vmem %s12, %s446
        %p448 = pneg %p337
        %p449 = pneg %p334
        %s450 = sand.u32 %s324, 1
        %s451 = scalar_lea.sflag [#allocation3], %s450
        %s452 = sand.u32 %s324, 1
        %s453 = smul.addr %s452, 8
        %s454 = scalar_lea.vmem [#allocation2], %s453
        %p455 = scmp.lt.s32.totalorder %s28, 1
        %s456 = scalar_select %p455, %s28, 1
        %s457 = smul.addr %s456, 8
        %s458 = scalar_lea.vmem %s0, %s457
        %s459 = smul.u32 2, %s28
        %p460 = scmp.lt.s32.totalorder %s459, 3
        %s461 = scalar_select %p460, %s459, 3
        %s462 = smul.addr %s461, 8
        %s463 = scalar_lea.vmem %s1, %s462
        %s464 = smul.u32 2, %s28
        %p465 = scmp.lt.s32.totalorder %s28, 1
        %s466 = scalar_select %p465, %s28, 1
        %s467 = smul.addr %s466, 8
        %s468 = scalar_lea.vmem %s12, %s467
        %v469 = vld [vmem:[%s11] sm:$0xff]
        %v470 = vld [vmem:[%s458] sm:$0xff]
        %vm471 = vcmask 261120
        %v472 = vsel %vm471, %v470, 0.0
        %473 = vadd.xlane.f32.xlu0 %v472
        %v474 = vpop.xlane.xlu0 %473
        %v475 = vrcp.pop 32.0
        %v476 = vmul.f32 %v474, %v475
        %v477 = vsub.f32 %v470, %v476
        %v478 = vmul.f32 %v477, %v477
        %v479 = vsel %vm471, %v478, 0.0
        %480 = vadd.xlane.f32.xlu0 %v479
        %v481 = vpop.xlane.xlu0 %480
        %v482 = vmul.f32 %v481, %v475
        %v483 = vadd.f32 %v482, 1e-05
        %v484 = vrsqrt.pop %v483
        %v485 = vmul.f32 %v477, %v484
        %v486 = vlaneseq
        %v487 = vshrl.u32 %v486, 7
        %v488 = vsub.s32 0, %v487
        %v489 = vrot.slane %v469, %v488
        %v490 = vmul.f32 %v485, %v489
        %v491 = vlaneseq
        %v492 = vshrl.u32 %v491, 7
        %v493 = vsub.s32 1, %v492
        %v494 = vrot.slane %v469, %v493
        %v495 = vadd.f32 %v490, %v494
        %v496 = vld [vmem:[%s463] sm:$0xff]
        %v497 = vld [vmem:[%s463 + $0x8] sm:$0xff]
        %v498 = vsel %vm471, %v496, 0.0
        %499 = vadd.xlane.f32.xlu0 %v498
        %v500 = vpop.xlane.xlu0 %499
        %v501 = vsel %vm471, %v497, 0.0
        %502 = vadd.xlane.f32.xlu0 %v501
        %v503 = vpop.xlane.xlu0 %502
        %v504 = vmul.f32 %v500, %v475
        %v505 = vmul.f32 %v503, %v475
        %v506 = vsub.f32 %v496, %v504
        %v507 = vsub.f32 %v497, %v505
        %v508 = vmul.f32 %v506, %v506
        %v509 = vmul.f32 %v507, %v507
        %v510 = vsel %vm471, %v508, 0.0
        %511 = vadd.xlane.f32.xlu0 %v510
        %v512 = vpop.xlane.xlu0 %511
        %v513 = vsel %vm471, %v509, 0.0
        %514 = vadd.xlane.f32.xlu0 %v513
        %v515 = vpop.xlane.xlu0 %514
        %v516 = vmul.f32 %v512, %v475
        %v517 = vmul.f32 %v515, %v475
        %v518 = vadd.f32 %v516, 1e-05
        %v519 = vadd.f32 %v517, 1e-05
        %v520 = vrsqrt.pop %v518
        %v521 = vrsqrt.pop %v519
        %v522 = vmul.f32 %v506, %v520
        %v523 = vmul.f32 %v507, %v521
        %v524 = vlaneseq
        %v525 = vshrl.u32 %v524, 7
        %v526 = vsub.s32 2, %v525
        %v527 = vrot.slane %v469, %v526
        %v528 = vmul.f32 %v522, %v527
        %v529 = vmul.f32 %v523, %v527
        %v530 = vlaneseq
        %v531 = vshrl.u32 %v530, 7
        %v532 = vsub.s32 3, %v531
        %v533 = vrot.slane %v469, %v532
        %v534 = vadd.f32 %v528, %v533
        %v535 = vadd.f32 %v529, %v533
        %v536 = vld [vmem:[%s3] sm:$0xff]
        %v537 = vld [vmem:[%s3 + $0x8] sm:$0xff]
        %v538 = vld [vmem:[%s3 + $0x10] sm:$0xff]
        %v539 = vld [vmem:[%s3 + $0x18] sm:$0xff]
        %v540 = vld [vmem:[%s4] sm:$0x1]
        %v542 = vlaneseq
        %v543 = vshrl.u32 %v542, 7
        %v544 = vsub.s32 0, %v543
        %v545 = vrot.slane %v540, %v544
        %v548 = vsel %vm471, %v495, 0
        %550 = vmatprep.subr.mxu0 0.0
        %551 = vmatpush1.msra.mxu0 %v536
        %552 = vmatprep.subr.mxu0 0.0
        %553 = vmatpush1.msra.mxu0 %v537
        %554 = vmatprep.subr.mxu0 0.0
        %555 = vmatpush1.msra.mxu0 %v538
        %556 = vmatprep.subr.mxu0 0.0
        %557 = vmatpush1.msra.mxu0 %v539
        %558 = vmatprep.subr.mxu0 0.0
        %559 = vmatpush1.msra.mxu0 0.0
        %560 = vmatprep.subr.mxu0 0.0
        %561 = vmatpush1.msra.mxu0 0.0
        %562 = vmatprep.subr.mxu0 0.0
        %563 = vmatpush1.msra.mxu0 0.0
        %564 = vmatprep.subr.mxu0 0.0
        %565 = vmatpush1.msra.mxu0 0.0
        %566 = vmatprep.subr.mxu0 0.0
        %567 = vmatpush1.msra.mxu0 0.0
        %568 = vmatprep.subr.mxu0 0.0
        %569 = vmatpush1.msra.mxu0 0.0
        %570 = vmatprep.subr.mxu0 0.0
        %571 = vmatpush1.msra.mxu0 0.0
        %572 = vmatprep.subr.mxu0 0.0
        %573 = vmatpush1.msra.mxu0 0.0
        %574 = vmatprep.subr.mxu0 0.0
        %575 = vmatpush1.msra.mxu0 0.0
        %576 = vmatprep.subr.mxu0 0.0
        %577 = vmatpush1.msra.mxu0 0.0
        %578 = vmatprep.subr.mxu0 0.0
        %579 = vmatpush1.msra.mxu0 0.0
        %580 = vmatprep.subr.mxu0 0.0
        %581 = vmatpush1.msra.mxu0 0.0
        %582 = vmatprep.subr.mxu0 0.0
        %583 = vmatpush1.msra.mxu0 0.0
        %584 = vmatprep.subr.mxu0 0.0
        %585 = vmatpush1.msra.mxu0 0.0
        %586 = vmatprep.subr.mxu0 0.0
        %587 = vmatpush1.msra.mxu0 0.0
        %588 = vmatprep.subr.mxu0 0.0
        %589 = vmatpush1.msra.mxu0 0.0
        %590 = vmatprep.subr.mxu0 0.0
        %591 = vmatpush1.msra.mxu0 0.0
        %592 = vmatprep.subr.mxu0 0.0
        %593 = vmatpush1.msra.mxu0 0.0
        %594 = vmatprep.subr.mxu0 0.0
        %595 = vmatpush1.msra.mxu0 0.0
        %596 = vmatprep.subr.mxu0 0.0
        %597 = vmatpush1.msra.mxu0 0.0
        %598 = vmatprep.subr.mxu0 0.0
        %599 = vmatpush1.msra.mxu0 0.0
        %600 = vmatprep.subr.mxu0 0.0
        %601 = vmatpush1.msra.mxu0 0.0
        %602 = vmatprep.subr.mxu0 0.0
        %603 = vmatpush1.msra.mxu0 0.0
        %604 = vmatprep.subr.mxu0 0.0
        %605 = vmatpush1.msra.mxu0 0.0
        %606 = vmatprep.subr.mxu0 0.0
        %607 = vmatpush1.msra.mxu0 0.0
        %608 = vmatprep.subr.mxu0 0.0
        %609 = vmatpush1.msra.mxu0 0.0
        %610 = vmatprep.subr.mxu0 0.0
        %611 = vmatpush1.msra.mxu0 0.0
        %612 = vmatprep.subr.mxu0 0.0
        %613 = vmatpush1.msra.mxu0 0.0
        %614 = vmatprep.mubr.f32.mxu0 0.0
        %615 = vmatmul.mubr.f32.gmra.mrb[0].mxu0 %v548
        %v616 = vpop.f32.mrb[0].mxu0
        %v617 = vadd.f32 %v545, %v616
        %v618 = vpop.f32.mrb[0].mxu0
        %619 = vdwg.mxu0
        %624 = vrot.lane.b32.xlu0 %v536, 96
        %v625 = vpop.permute.xlu0 %624
        %626 = vrot.lane.b32.xlu0 %v537, 96
        %v627 = vpop.permute.xlu0 %626
        %628 = vrot.lane.b32.xlu0 %v538, 96
        %v629 = vpop.permute.xlu0 %628
        %630 = vrot.lane.b32.xlu0 %v539, 96
        %v631 = vpop.permute.xlu0 %630
        %636 = vrot.lane.b32.xlu0 %v545, 96
        %v637 = vpop.permute.xlu0 %636
        %v640 = vsel %vm471, %v534, 0
        %v643 = vsel %vm471, %v535, 0
        %645 = vmatprep.subr.mxu0 0.0
        %646 = vmatpush1.msra.mxu0 %v625
        %647 = vmatprep.subr.mxu0 0.0
        %648 = vmatpush1.msra.mxu0 %v627
        %649 = vmatprep.subr.mxu0 0.0
        %650 = vmatpush1.msra.mxu0 %v629
        %651 = vmatprep.subr.mxu0 0.0
        %652 = vmatpush1.msra.mxu0 %v631
        %653 = vmatprep.subr.mxu0 0.0
        %654 = vmatpush1.msra.mxu0 0.0
        %655 = vmatprep.subr.mxu0 0.0
        %656 = vmatpush1.msra.mxu0 0.0
        %657 = vmatprep.subr.mxu0 0.0
        %658 = vmatpush1.msra.mxu0 0.0
        %659 = vmatprep.subr.mxu0 0.0
        %660 = vmatpush1.msra.mxu0 0.0
        %661 = vmatprep.subr.mxu0 0.0
        %662 = vmatpush1.msra.mxu0 0.0
        %663 = vmatprep.subr.mxu0 0.0
        %664 = vmatpush1.msra.mxu0 0.0
        %665 = vmatprep.subr.mxu0 0.0
        %666 = vmatpush1.msra.mxu0 0.0
        %667 = vmatprep.subr.mxu0 0.0
        %668 = vmatpush1.msra.mxu0 0.0
        %669 = vmatprep.subr.mxu0 0.0
        %670 = vmatpush1.msra.mxu0 0.0
        %671 = vmatprep.subr.mxu0 0.0
        %672 = vmatpush1.msra.mxu0 0.0
        %673 = vmatprep.subr.mxu0 0.0
        %674 = vmatpush1.msra.mxu0 0.0
        %675 = vmatprep.subr.mxu0 0.0
        %676 = vmatpush1.msra.mxu0 0.0
        %677 = vmatprep.subr.mxu0 0.0
        %678 = vmatpush1.msra.mxu0 0.0
        %679 = vmatprep.subr.mxu0 0.0
        %680 = vmatpush1.msra.mxu0 0.0
        %681 = vmatprep.subr.mxu0 0.0
        %682 = vmatpush1.msra.mxu0 0.0
        %683 = vmatprep.subr.mxu0 0.0
        %684 = vmatpush1.msra.mxu0 0.0
        %685 = vmatprep.subr.mxu0 0.0
        %686 = vmatpush1.msra.mxu0 0.0
        %687 = vmatprep.subr.mxu0 0.0
        %688 = vmatpush1.msra.mxu0 0.0
        %689 = vmatprep.subr.mxu0 0.0
        %690 = vmatpush1.msra.mxu0 0.0
        %691 = vmatprep.subr.mxu0 0.0
        %692 = vmatpush1.msra.mxu0 0.0
        %693 = vmatprep.subr.mxu0 0.0
        %694 = vmatpush1.msra.mxu0 0.0
        %695 = vmatprep.subr.mxu0 0.0
        %696 = vmatpush1.msra.mxu0 0.0
        %697 = vmatprep.subr.mxu0 0.0
        %698 = vmatpush1.msra.mxu0 0.0
        %699 = vmatprep.subr.mxu0 0.0
        %700 = vmatpush1.msra.mxu0 0.0
        %701 = vmatprep.subr.mxu0 0.0
        %702 = vmatpush1.msra.mxu0 0.0
        %703 = vmatprep.subr.mxu0 0.0
        %704 = vmatpush1.msra.mxu0 0.0
        %705 = vmatprep.subr.mxu0 0.0
        %706 = vmatpush1.msra.mxu0 0.0
        %707 = vmatprep.subr.mxu0 0.0
        %708 = vmatpush1.msra.mxu0 0.0
        %709 = vmatprep.mubr.f32.mxu0 0.0
        %710 = vmatmul.mubr.f32.gmra.mrb[0].mxu0 %v640
        %v711 = vpop.f32.mrb[0].mxu0
        %v712 = vadd.f32 %v637, %v711
        %v713 = vpop.f32.mrb[0].mxu0
        %714 = vmatprep.mubr.f32.mxu0 0.0
        %715 = vmatmul.mubr.f32.gmra.mrb[0].mxu0 %v643
        %v716 = vpop.f32.mrb[0].mxu0
        %v717 = vadd.f32 %v637, %v716
        %v718 = vpop.f32.mrb[0].mxu0
        %719 = vdwg.mxu0
        %720 = vrot.lane.b32.xlu0 %v536, 64
        %v721 = vpop.permute.xlu0 %720
        %722 = vrot.lane.b32.xlu0 %v537, 64
        %v723 = vpop.permute.xlu0 %722
        %724 = vrot.lane.b32.xlu0 %v538, 64
        %v725 = vpop.permute.xlu0 %724
        %726 = vrot.lane.b32.xlu0 %v539, 64
        %v727 = vpop.permute.xlu0 %726
        %732 = vrot.lane.b32.xlu0 %v545, 64
        %v733 = vpop.permute.xlu0 %732
        %735 = vmatprep.subr.mxu0 0.0
        %736 = vmatpush1.msra.mxu0 %v721
        %737 = vmatprep.subr.mxu0 0.0
        %738 = vmatpush1.msra.mxu0 %v723
        %739 = vmatprep.subr.mxu0 0.0
        %740 = vmatpush1.msra.mxu0 %v725
        %741 = vmatprep.subr.mxu0 0.0
        %742 = vmatpush1.msra.mxu0 %v727
        %743 = vmatprep.subr.mxu0 0.0
        %744 = vmatpush1.msra.mxu0 0.0
        %745 = vmatprep.subr.mxu0 0.0
        %746 = vmatpush1.msra.mxu0 0.0
        %747 = vmatprep.subr.mxu0 0.0
        %748 = vmatpush1.msra.mxu0 0.0
        %749 = vmatprep.subr.mxu0 0.0
        %750 = vmatpush1.msra.mxu0 0.0
        %751 = vmatprep.subr.mxu0 0.0
        %752 = vmatpush1.msra.mxu0 0.0
        %753 = vmatprep.subr.mxu0 0.0
        %754 = vmatpush1.msra.mxu0 0.0
        %755 = vmatprep.subr.mxu0 0.0
        %756 = vmatpush1.msra.mxu0 0.0
        %757 = vmatprep.subr.mxu0 0.0
        %758 = vmatpush1.msra.mxu0 0.0
        %759 = vmatprep.subr.mxu0 0.0
        %760 = vmatpush1.msra.mxu0 0.0
        %761 = vmatprep.subr.mxu0 0.0
        %762 = vmatpush1.msra.mxu0 0.0
        %763 = vmatprep.subr.mxu0 0.0
        %764 = vmatpush1.msra.mxu0 0.0
        %765 = vmatprep.subr.mxu0 0.0
        %766 = vmatpush1.msra.mxu0 0.0
        %767 = vmatprep.subr.mxu0 0.0
        %768 = vmatpush1.msra.mxu0 0.0
        %769 = vmatprep.subr.mxu0 0.0
        %770 = vmatpush1.msra.mxu0 0.0
        %771 = vmatprep.subr.mxu0 0.0
        %772 = vmatpush1.msra.mxu0 0.0
        %773 = vmatprep.subr.mxu0 0.0
        %774 = vmatpush1.msra.mxu0 0.0
        %775 = vmatprep.subr.mxu0 0.0
        %776 = vmatpush1.msra.mxu0 0.0
        %777 = vmatprep.subr.mxu0 0.0
        %778 = vmatpush1.msra.mxu0 0.0
        %779 = vmatprep.subr.mxu0 0.0
        %780 = vmatpush1.msra.mxu0 0.0
        %781 = vmatprep.subr.mxu0 0.0
        %782 = vmatpush1.msra.mxu0 0.0
        %783 = vmatprep.subr.mxu0 0.0
        %784 = vmatpush1.msra.mxu0 0.0
        %785 = vmatprep.subr.mxu0 0.0
        %786 = vmatpush1.msra.mxu0 0.0
        %787 = vmatprep.subr.mxu0 0.0
        %788 = vmatpush1.msra.mxu0 0.0
        %789 = vmatprep.subr.mxu0 0.0
        %790 = vmatpush1.msra.mxu0 0.0
        %791 = vmatprep.subr.mxu0 0.0
        %792 = vmatpush1.msra.mxu0 0.0
        %793 = vmatprep.subr.mxu0 0.0
        %794 = vmatpush1.msra.mxu0 0.0
        %795 = vmatprep.subr.mxu0 0.0
        %796 = vmatpush1.msra.mxu0 0.0
        %797 = vmatprep.subr.mxu0 0.0
        %798 = vmatpush1.msra.mxu0 0.0
        %799 = vmatprep.mubr.f32.mxu0 0.0
        %800 = vmatmul.mubr.f32.gmra.mrb[0].mxu0 %v640
        %v801 = vpop.f32.mrb[0].mxu0
        %v802 = vadd.f32 %v733, %v801
        %v803 = vpop.f32.mrb[0].mxu0
        %804 = vmatprep.mubr.f32.mxu0 0.0
        %805 = vmatmul.mubr.f32.gmra.mrb[0].mxu0 %v643
        %v806 = vpop.f32.mrb[0].mxu0
        %v807 = vadd.f32 %v733, %v806
        %v808 = vpop.f32.mrb[0].mxu0
        %809 = vdwg.mxu0
        %v810 = vmul.f32 %v617, 0.35355338
        %v811 = vld [vmem:[%s2] sm:$0xff]
        %vm812 = vcmask 64512
        %v814 = vsel %vm812, %v810, 0
        %v817 = vsel %vm812, %v712, 0
        %v820 = vsel %vm812, %v717, 0
        %822 = vmatprep.subr.mxu0 0.0
        %823 = vmatpush1.xpose.msra.mxu0 %v817
        %824 = vmatprep.subr.mxu0 0.0
        %825 = vmatpush1.xpose.msra.mxu0 %v820
        %826 = vmatprep.subr.mxu0 0.0
        %827 = vmatpush1.xpose.msra.mxu0 0.0
        %828 = vmatprep.subr.mxu0 0.0
        %829 = vmatpush1.xpose.msra.mxu0 0.0
        %830 = vmatprep.subr.mxu0 0.0
        %831 = vmatpush1.xpose.msra.mxu0 0.0
        %832 = vmatprep.subr.mxu0 0.0
        %833 = vmatpush1.xpose.msra.mxu0 0.0
        %834 = vmatprep.subr.mxu0 0.0
        %835 = vmatpush1.xpose.msra.mxu0 0.0
        %836 = vmatprep.subr.mxu0 0.0
        %837 = vmatpush1.xpose.msra.mxu0 0.0
        %838 = vmatprep.subr.mxu0 0.0
        %839 = vmatpush1.xpose.msra.mxu0 0.0
        %840 = vmatprep.subr.mxu0 0.0
        %841 = vmatpush1.xpose.msra.mxu0 0.0
        %842 = vmatprep.subr.mxu0 0.0
        %843 = vmatpush1.xpose.msra.mxu0 0.0
        %844 = vmatprep.subr.mxu0 0.0
        %845 = vmatpush1.xpose.msra.mxu0 0.0
        %846 = vmatprep.subr.mxu0 0.0
        %847 = vmatpush1.xpose.msra.mxu0 0.0
        %848 = vmatprep.subr.mxu0 0.0
        %849 = vmatpush1.xpose.msra.mxu0 0.0
        %850 = vmatprep.subr.mxu0 0.0
        %851 = vmatpush1.xpose.msra.mxu0 0.0
        %852 = vmatprep.subr.mxu0 0.0
        %853 = vmatpush1.xpose.msra.mxu0 0.0
        %854 = vmatprep.subr.mxu0 0.0
        %855 = vmatpush1.xpose.msra.mxu0 0.0
        %856 = vmatprep.subr.mxu0 0.0
        %857 = vmatpush1.xpose.msra.mxu0 0.0
        %858 = vmatprep.subr.mxu0 0.0
        %859 = vmatpush1.xpose.msra.mxu0 0.0
        %860 = vmatprep.subr.mxu0 0.0
        %861 = vmatpush1.xpose.msra.mxu0 0.0
        %862 = vmatprep.subr.mxu0 0.0
        %863 = vmatpush1.xpose.msra.mxu0 0.0
        %864 = vmatprep.subr.mxu0 0.0
        %865 = vmatpush1.xpose.msra.mxu0 0.0
        %866 = vmatprep.subr.mxu0 0.0
        %867 = vmatpush1.xpose.msra.mxu0 0.0
        %868 = vmatprep.subr.mxu0 0.0
        %869 = vmatpush1.xpose.msra.mxu0 0.0
        %870 = vmatprep.subr.mxu0 0.0
        %871 = vmatpush1.xpose.msra.mxu0 0.0
        %872 = vmatprep.subr.mxu0 0.0
        %873 = vmatpush1.xpose.msra.mxu0 0.0
        %874 = vmatprep.subr.mxu0 0.0
        %875 = vmatpush1.xpose.msra.mxu0 0.0
        %876 = vmatprep.subr.mxu0 0.0
        %877 = vmatpush1.xpose.msra.mxu0 0.0
        %878 = vmatprep.subr.mxu0 0.0
        %879 = vmatpush1.xpose.msra.mxu0 0.0
        %880 = vmatprep.subr.mxu0 0.0
        %881 = vmatpush1.xpose.msra.mxu0 0.0
        %882 = vmatprep.subr.mxu0 0.0
        %883 = vmatpush1.xpose.msra.mxu0 0.0
        %884 = vmatprep.subr.mxu0 0.0
        %885 = vmatpush1.xpose.msra.mxu0 0.0
        %886 = vmatprep.mubr.f32.mxu0 0.0
        %887 = vmatmul.mubr.f32.gmra.mrb[0].mxu0 %v814
        %v888 = vpop.f32.mrb[0].mxu0
        %v889 = vadd.f32 %v811, %v888
        %v890 = vpop.f32.mrb[0].mxu0
        %891 = vdwg.mxu0
        %vm892 = vcmask 130048
        %v893 = vsel %vm892, %v889, -inf
        %894 = vmax.xlane.f32.xlu0 %v893
        %v895 = vpop.xlane.xlu0 %894
        %v896 = vsub.f32 %v889, %v895
        %v897 = vmul.f32 %v896, 1.442695
        %v898 = vpow.pop %v897
        %v899 = vsel %vm892, %v898, 0.0
        %900 = vadd.xlane.f32.xlu0 %v899
        %v901 = vpop.xlane.xlu0 %900
        %v902 = vrcp.pop %v901
        %v903 = vmul.f32 %v898, %v902
        %v904 = vadd.f32 %v903, 0.0
        %v906 = vsel %vm892, %v903, 0
        %908 = vmatprep.subr.mxu0 0.0
        %909 = vmatpush1.msra.mxu0 %v802
        %910 = vmatprep.subr.mxu0 0.0
        %911 = vmatpush1.msra.mxu0 %v807
        %912 = vmatprep.subr.mxu0 0.0
        %913 = vmatpush1.msra.mxu0 0.0
        %914 = vmatprep.subr.mxu0 0.0
        %915 = vmatpush1.msra.mxu0 0.0
        %916 = vmatprep.subr.mxu0 0.0
        %917 = vmatpush1.msra.mxu0 0.0
        %918 = vmatprep.subr.mxu0 0.0
        %919 = vmatpush1.msra.mxu0 0.0
        %920 = vmatprep.subr.mxu0 0.0
        %921 = vmatpush1.msra.mxu0 0.0
        %922 = vmatprep.subr.mxu0 0.0
        %923 = vmatpush1.msra.mxu0 0.0
        %924 = vmatprep.subr.mxu0 0.0
        %925 = vmatpush1.msra.mxu0 0.0
        %926 = vmatprep.subr.mxu0 0.0
        %927 = vmatpush1.msra.mxu0 0.0
        %928 = vmatprep.subr.mxu0 0.0
        %929 = vmatpush1.msra.mxu0 0.0
        %930 = vmatprep.subr.mxu0 0.0
        %931 = vmatpush1.msra.mxu0 0.0
        %932 = vmatprep.subr.mxu0 0.0
        %933 = vmatpush1.msra.mxu0 0.0
        %934 = vmatprep.subr.mxu0 0.0
        %935 = vmatpush1.msra.mxu0 0.0
        %936 = vmatprep.subr.mxu0 0.0
        %937 = vmatpush1.msra.mxu0 0.0
        %938 = vmatprep.subr.mxu0 0.0
        %939 = vmatpush1.msra.mxu0 0.0
        %940 = vmatprep.subr.mxu0 0.0
        %941 = vmatpush1.msra.mxu0 0.0
        %942 = vmatprep.subr.mxu0 0.0
        %943 = vmatpush1.msra.mxu0 0.0
        %944 = vmatprep.subr.mxu0 0.0
        %945 = vmatpush1.msra.mxu0 0.0
        %946 = vmatprep.subr.mxu0 0.0
        %947 = vmatpush1.msra.mxu0 0.0
        %948 = vmatprep.subr.mxu0 0.0
        %949 = vmatpush1.msra.mxu0 0.0
        %950 = vmatprep.subr.mxu0 0.0
        %951 = vmatpush1.msra.mxu0 0.0
        %952 = vmatprep.subr.mxu0 0.0
        %953 = vmatpush1.msra.mxu0 0.0
        %954 = vmatprep.subr.mxu0 0.0
        %955 = vmatpush1.msra.mxu0 0.0
        %956 = vmatprep.subr.mxu0 0.0
        %957 = vmatpush1.msra.mxu0 0.0
        %958 = vmatprep.subr.mxu0 0.0
        %959 = vmatpush1.msra.mxu0 0.0
        %960 = vmatprep.subr.mxu0 0.0
        %961 = vmatpush1.msra.mxu0 0.0
        %962 = vmatprep.subr.mxu0 0.0
        %963 = vmatpush1.msra.mxu0 0.0
        %964 = vmatprep.subr.mxu0 0.0
        %965 = vmatpush1.msra.mxu0 0.0
        %966 = vmatprep.subr.mxu0 0.0
        %967 = vmatpush1.msra.mxu0 0.0
        %968 = vmatprep.subr.mxu0 0.0
        %969 = vmatpush1.msra.mxu0 0.0
        %970 = vmatprep.subr.mxu0 0.0
        %971 = vmatpush1.msra.mxu0 0.0
        %972 = vmatprep.mubr.f32.mxu0 0.0
        %973 = vmatmul.mubr.f32.gmra.mrb[0].mxu0 %v906
        %v974 = vpop.f32.mrb[0].mxu0
        %v975 = vadd.f32 0.0, %v974
        %v976 = vpop.f32.mrb[0].mxu0
        %977 = vdwg.mxu0
        %978 = vrot.lane.b32.xlu0 %v810, 120
        %v979 = vpop.permute.xlu0 %978
        %980 = vrot.lane.b32.xlu0 %v712, 120
        %v981 = vpop.permute.xlu0 %980
        %982 = vrot.lane.b32.xlu0 %v717, 120
        %v983 = vpop.permute.xlu0 %982
        %v984 = vsel %vm812, %v979, 0
        %v986 = vsel %vm812, %v981, 0
        %v988 = vsel %vm812, %v983, 0
        %990 = vmatprep.subr.mxu0 0.0
        %991 = vmatpush1.xpose.msra.mxu0 %v986
        %992 = vmatprep.subr.mxu0 0.0
        %993 = vmatpush1.xpose.msra.mxu0 %v988
        %994 = vmatprep.subr.mxu0 0.0
        %995 = vmatpush1.xpose.msra.mxu0 0.0
        %996 = vmatprep.subr.mxu0 0.0
        %997 = vmatpush1.xpose.msra.mxu0 0.0
        %998 = vmatprep.subr.mxu0 0.0
        %999 = vmatpush1.xpose.msra.mxu0 0.0
        %1000 = vmatprep.subr.mxu0 0.0
        %1001 = vmatpush1.xpose.msra.mxu0 0.0
        %1002 = vmatprep.subr.mxu0 0.0
        %1003 = vmatpush1.xpose.msra.mxu0 0.0
        %1004 = vmatprep.subr.mxu0 0.0
        %1005 = vmatpush1.xpose.msra.mxu0 0.0
        %1006 = vmatprep.subr.mxu0 0.0
        %1007 = vmatpush1.xpose.msra.mxu0 0.0
        %1008 = vmatprep.subr.mxu0 0.0
        %1009 = vmatpush1.xpose.msra.mxu0 0.0
        %1010 = vmatprep.subr.mxu0 0.0
        %1011 = vmatpush1.xpose.msra.mxu0 0.0
        %1012 = vmatprep.subr.mxu0 0.0
        %1013 = vmatpush1.xpose.msra.mxu0 0.0
        %1014 = vmatprep.subr.mxu0 0.0
        %1015 = vmatpush1.xpose.msra.mxu0 0.0
        %1016 = vmatprep.subr.mxu0 0.0
        %1017 = vmatpush1.xpose.msra.mxu0 0.0
        %1018 = vmatprep.subr.mxu0 0.0
        %1019 = vmatpush1.xpose.msra.mxu0 0.0
        %1020 = vmatprep.subr.mxu0 0.0
        %1021 = vmatpush1.xpose.msra.mxu0 0.0
        %1022 = vmatprep.subr.mxu0 0.0
        %1023 = vmatpush1.xpose.msra.mxu0 0.0
        %1024 = vmatprep.subr.mxu0 0.0
        %1025 = vmatpush1.xpose.msra.mxu0 0.0
        %1026 = vmatprep.subr.mxu0 0.0
        %1027 = vmatpush1.xpose.msra.mxu0 0.0
        %1028 = vmatprep.subr.mxu0 0.0
        %1029 = vmatpush1.xpose.msra.mxu0 0.0
        %1030 = vmatprep.subr.mxu0 0.0
        %1031 = vmatpush1.xpose.msra.mxu0 0.0
        %1032 = vmatprep.subr.mxu0 0.0
        %1033 = vmatpush1.xpose.msra.mxu0 0.0
        %1034 = vmatprep.subr.mxu0 0.0
        %1035 = vmatpush1.xpose.msra.mxu0 0.0
        %1036 = vmatprep.subr.mxu0 0.0
        %1037 = vmatpush1.xpose.msra.mxu0 0.0
        %1038 = vmatprep.subr.mxu0 0.0
        %1039 = vmatpush1.xpose.msra.mxu0 0.0
        %1040 = vmatprep.subr.mxu0 0.0
        %1041 = vmatpush1.xpose.msra.mxu0 0.0
        %1042 = vmatprep.subr.mxu0 0.0
        %1043 = vmatpush1.xpose.msra.mxu0 0.0
        %1044 = vmatprep.subr.mxu0 0.0
        %1045 = vmatpush1.xpose.msra.mxu0 0.0
        %1046 = vmatprep.subr.mxu0 0.0
        %1047 = vmatpush1.xpose.msra.mxu0 0.0
        %1048 = vmatprep.subr.mxu0 0.0
        %1049 = vmatpush1.xpose.msra.mxu0 0.0
        %1050 = vmatprep.subr.mxu0 0.0
        %1051 = vmatpush1.xpose.msra.mxu0 0.0
        %1052 = vmatprep.subr.mxu0 0.0
        %1053 = vmatpush1.xpose.msra.mxu0 0.0
        %1054 = vmatprep.mubr.f32.mxu0 0.0
        %1055 = vmatmul.mubr.f32.gmra.mrb[0].mxu0 %v984
        %v1056 = vpop.f32.mrb[0].mxu0
        %v1057 = vadd.f32 %v811, %v1056
        %v1058 = vpop.f32.mrb[0].mxu0
        %1059 = vdwg.mxu0
        %v1060 = vsel %vm892, %v1057, -inf
        %1061 = vmax.xlane.f32.xlu0 %v1060
        %v1062 = vpop.xlane.xlu0 %1061
        %v1063 = vsub.f32 %v1057, %v1062
        %v1064 = vmul.f32 %v1063, 1.442695
        %v1065 = vpow.pop %v1064
        %v1066 = vsel %vm892, %v1065, 0.0
        %1067 = vadd.xlane.f32.xlu0 %v1066
        %v1068 = vpop.xlane.xlu0 %1067
        %v1069 = vrcp.pop %v1068
        %v1070 = vmul.f32 %v1065, %v1069
        %v1071 = vadd.f32 %v904, %v1070
        %1074 = vrot.lane.b32.xlu0 %v802, 120
        %v1075 = vpop.permute.xlu0 %1074
        %1076 = vrot.lane.b32.xlu0 %v807, 120
        %v1077 = vpop.permute.xlu0 %1076
        %v1081 = vsel %vm892, %v1070, 0
        %1083 = vmatprep.subr.mxu0 0.0
        %1084 = vmatpush1.msra.mxu0 %v1075
        %1085 = vmatprep.subr.mxu0 0.0
        %1086 = vmatpush1.msra.mxu0 %v1077
        %1087 = vmatprep.subr.mxu0 0.0
        %1088 = vmatpush1.msra.mxu0 0.0
        %1089 = vmatprep.subr.mxu0 0.0
        %1090 = vmatpush1.msra.mxu0 0.0
        %1091 = vmatprep.subr.mxu0 0.0
        %1092 = vmatpush1.msra.mxu0 0.0
        %1093 = vmatprep.subr.mxu0 0.0
        %1094 = vmatpush1.msra.mxu0 0.0
        %1095 = vmatprep.subr.mxu0 0.0
        %1096 = vmatpush1.msra.mxu0 0.0
        %1097 = vmatprep.subr.mxu0 0.0
        %1098 = vmatpush1.msra.mxu0 0.0
        %1099 = vmatprep.subr.mxu0 0.0
        %1100 = vmatpush1.msra.mxu0 0.0
        %1101 = vmatprep.subr.mxu0 0.0
        %1102 = vmatpush1.msra.mxu0 0.0
        %1103 = vmatprep.subr.mxu0 0.0
        %1104 = vmatpush1.msra.mxu0 0.0
        %1105 = vmatprep.subr.mxu0 0.0
        %1106 = vmatpush1.msra.mxu0 0.0
        %1107 = vmatprep.subr.mxu0 0.0
        %1108 = vmatpush1.msra.mxu0 0.0
        %1109 = vmatprep.subr.mxu0 0.0
        %1110 = vmatpush1.msra.mxu0 0.0
        %1111 = vmatprep.subr.mxu0 0.0
        %1112 = vmatpush1.msra.mxu0 0.0
        %1113 = vmatprep.subr.mxu0 0.0
        %1114 = vmatpush1.msra.mxu0 0.0
        %1115 = vmatprep.subr.mxu0 0.0
        %1116 = vmatpush1.msra.mxu0 0.0
        %1117 = vmatprep.subr.mxu0 0.0
        %1118 = vmatpush1.msra.mxu0 0.0
        %1119 = vmatprep.subr.mxu0 0.0
        %1120 = vmatpush1.msra.mxu0 0.0
        %1121 = vmatprep.subr.mxu0 0.0
        %1122 = vmatpush1.msra.mxu0 0.0
        %1123 = vmatprep.subr.mxu0 0.0
        %1124 = vmatpush1.msra.mxu0 0.0
        %1125 = vmatprep.subr.mxu0 0.0
        %1126 = vmatpush1.msra.mxu0 0.0
        %1127 = vmatprep.subr.mxu0 0.0
        %1128 = vmatpush1.msra.mxu0 0.0
        %1129 = vmatprep.subr.mxu0 0.0
        %1130 = vmatpush1.msra.mxu0 0.0
        %1131 = vmatprep.subr.mxu0 0.0
        %1132 = vmatpush1.msra.mxu0 0.0
        %1133 = vmatprep.subr.mxu0 0.0
        %1134 = vmatpush1.msra.mxu0 0.0
        %1135 = vmatprep.subr.mxu0 0.0
        %1136 = vmatpush1.msra.mxu0 0.0
        %1137 = vmatprep.subr.mxu0 0.0
        %1138 = vmatpush1.msra.mxu0 0.0
        %1139 = vmatprep.subr.mxu0 0.0
        %1140 = vmatpush1.msra.mxu0 0.0
        %1141 = vmatprep.subr.mxu0 0.0
        %1142 = vmatpush1.msra.mxu0 0.0
        %1143 = vmatprep.subr.mxu0 0.0
        %1144 = vmatpush1.msra.mxu0 0.0
        %1145 = vmatprep.subr.mxu0 0.0
        %1146 = vmatpush1.msra.mxu0 0.0
        %1147 = vmatprep.mubr.f32.mxu0 0.0
        %1148 = vmatmul.mubr.f32.gmra.mrb[0].mxu0 %v1081
        %v1149 = vpop.f32.mrb[0].mxu0
        %v1150 = vadd.f32 0.0, %v1149
        %v1151 = vpop.f32.mrb[0].mxu0
        %1152 = vdwg.mxu0
        %1153 = vrot.lane.b32.xlu0 %v810, 112
        %v1154 = vpop.permute.xlu0 %1153
        %1155 = vrot.lane.b32.xlu0 %v712, 112
        %v1156 = vpop.permute.xlu0 %1155
        %1157 = vrot.lane.b32.xlu0 %v717, 112
        %v1158 = vpop.permute.xlu0 %1157
        %v1159 = vsel %vm812, %v1154, 0
        %v1161 = vsel %vm812, %v1156, 0
        %v1163 = vsel %vm812, %v1158, 0
        %1165 = vmatprep.subr.mxu0 0.0
        %1166 = vmatpush1.xpose.msra.mxu0 %v1161
        %1167 = vmatprep.subr.mxu0 0.0
        %1168 = vmatpush1.xpose.msra.mxu0 %v1163
        %1169 = vmatprep.subr.mxu0 0.0
        %1170 = vmatpush1.xpose.msra.mxu0 0.0
        %1171 = vmatprep.subr.mxu0 0.0
        %1172 = vmatpush1.xpose.msra.mxu0 0.0
        %1173 = vmatprep.subr.mxu0 0.0
        %1174 = vmatpush1.xpose.msra.mxu0 0.0
        %1175 = vmatprep.subr.mxu0 0.0
        %1176 = vmatpush1.xpose.msra.mxu0 0.0
        %1177 = vmatprep.subr.mxu0 0.0
        %1178 = vmatpush1.xpose.msra.mxu0 0.0
        %1179 = vmatprep.subr.mxu0 0.0
        %1180 = vmatpush1.xpose.msra.mxu0 0.0
        %1181 = vmatprep.subr.mxu0 0.0
        %1182 = vmatpush1.xpose.msra.mxu0 0.0
        %1183 = vmatprep.subr.mxu0 0.0
        %1184 = vmatpush1.xpose.msra.mxu0 0.0
        %1185 = vmatprep.subr.mxu0 0.0
        %1186 = vmatpush1.xpose.msra.mxu0 0.0
        %1187 = vmatprep.subr.mxu0 0.0
        %1188 = vmatpush1.xpose.msra.mxu0 0.0
        %1189 = vmatprep.subr.mxu0 0.0
        %1190 = vmatpush1.xpose.msra.mxu0 0.0
        %1191 = vmatprep.subr.mxu0 0.0
        %1192 = vmatpush1.xpose.msra.mxu0 0.0
        %1193 = vmatprep.subr.mxu0 0.0
        %1194 = vmatpush1.xpose.msra.mxu0 0.0
        %1195 = vmatprep.subr.mxu0 0.0
        %1196 = vmatpush1.xpose.msra.mxu0 0.0
        %1197 = vmatprep.subr.mxu0 0.0
        %1198 = vmatpush1.xpose.msra.mxu0 0.0
        %1199 = vmatprep.subr.mxu0 0.0
        %1200 = vmatpush1.xpose.msra.mxu0 0.0
        %1201 = vmatprep.subr.mxu0 0.0
        %1202 = vmatpush1.xpose.msra.mxu0 0.0
        %1203 = vmatprep.subr.mxu0 0.0
        %1204 = vmatpush1.xpose.msra.mxu0 0.0
        %1205 = vmatprep.subr.mxu0 0.0
        %1206 = vmatpush1.xpose.msra.mxu0 0.0
        %1207 = vmatprep.subr.mxu0 0.0
        %1208 = vmatpush1.xpose.msra.mxu0 0.0
        %1209 = vmatprep.subr.mxu0 0.0
        %1210 = vmatpush1.xpose.msra.mxu0 0.0
        %1211 = vmatprep.subr.mxu0 0.0
        %1212 = vmatpush1.xpose.msra.mxu0 0.0
        %1213 = vmatprep.subr.mxu0 0.0
        %1214 = vmatpush1.xpose.msra.mxu0 0.0
        %1215 = vmatprep.subr.mxu0 0.0
        %1216 = vmatpush1.xpose.msra.mxu0 0.0
        %1217 = vmatprep.subr.mxu0 0.0
        %1218 = vmatpush1.xpose.msra.mxu0 0.0
        %1219 = vmatprep.subr.mxu0 0.0
        %1220 = vmatpush1.xpose.msra.mxu0 0.0
        %1221 = vmatprep.subr.mxu0 0.0
        %1222 = vmatpush1.xpose.msra.mxu0 0.0
        %1223 = vmatprep.subr.mxu0 0.0
        %1224 = vmatpush1.xpose.msra.mxu0 0.0
        %1225 = vmatprep.subr.mxu0 0.0
        %1226 = vmatpush1.xpose.msra.mxu0 0.0
        %1227 = vmatprep.subr.mxu0 0.0
        %1228 = vmatpush1.xpose.msra.mxu0 0.0
        %1229 = vmatprep.mubr.f32.mxu0 0.0
        %1230 = vmatmul.mubr.f32.gmra.mrb[0].mxu0 %v1159
        %v1231 = vpop.f32.mrb[0].mxu0
        %v1232 = vadd.f32 %v811, %v1231
        %v1233 = vpop.f32.mrb[0].mxu0
        %1234 = vdwg.mxu0
        %v1235 = vsel %vm892, %v1232, -inf
        %1236 = vmax.xlane.f32.xlu0 %v1235
        %v1237 = vpop.xlane.xlu0 %1236
        %v1238 = vsub.f32 %v1232, %v1237
        %v1239 = vmul.f32 %v1238, 1.442695
        %v1240 = vpow.pop %v1239
        %v1241 = vsel %vm892, %v1240, 0.0
        %1242 = vadd.xlane.f32.xlu0 %v1241
        %v1243 = vpop.xlane.xlu0 %1242
        %v1244 = vrcp.pop %v1243
        %v1245 = vmul.f32 %v1240, %v1244
        %v1246 = vadd.f32 %v1071, %v1245
        %1247 = vrot.lane.b32.xlu0 %v802, 112
        %v1248 = vpop.permute.xlu0 %1247
        %1249 = vrot.lane.b32.xlu0 %v807, 112
        %v1250 = vpop.permute.xlu0 %1249
        %v1254 = vsel %vm892, %v1245, 0
        %1256 = vmatprep.subr.mxu0 0.0
        %1257 = vmatpush1.msra.mxu0 %v1248
        %1258 = vmatprep.subr.mxu0 0.0
        %1259 = vmatpush1.msra.mxu0 %v1250
        %1260 = vmatprep.subr.mxu0 0.0
        %1261 = vmatpush1.msra.mxu0 0.0
        %1262 = vmatprep.subr.mxu0 0.0
        %1263 = vmatpush1.msra.mxu0 0.0
        %1264 = vmatprep.subr.mxu0 0.0
        %1265 = vmatpush1.msra.mxu0 0.0
        %1266 = vmatprep.subr.mxu0 0.0
        %1267 = vmatpush1.msra.mxu0 0.0
        %1268 = vmatprep.subr.mxu0 0.0
        %1269 = vmatpush1.msra.mxu0 0.0
        %1270 = vmatprep.subr.mxu0 0.0
        %1271 = vmatpush1.msra.mxu0 0.0
        %1272 = vmatprep.subr.mxu0 0.0
        %1273 = vmatpush1.msra.mxu0 0.0
        %1274 = vmatprep.subr.mxu0 0.0
        %1275 = vmatpush1.msra.mxu0 0.0
        %1276 = vmatprep.subr.mxu0 0.0
        %1277 = vmatpush1.msra.mxu0 0.0
        %1278 = vmatprep.subr.mxu0 0.0
        %1279 = vmatpush1.msra.mxu0 0.0
        %1280 = vmatprep.subr.mxu0 0.0
        %1281 = vmatpush1.msra.mxu0 0.0
        %1282 = vmatprep.subr.mxu0 0.0
        %1283 = vmatpush1.msra.mxu0 0.0
        %1284 = vmatprep.subr.mxu0 0.0
        %1285 = vmatpush1.msra.mxu0 0.0
        %1286 = vmatprep.subr.mxu0 0.0
        %1287 = vmatpush1.msra.mxu0 0.0
        %1288 = vmatprep.subr.mxu0 0.0
        %1289 = vmatpush1.msra.mxu0 0.0
        %1290 = vmatprep.subr.mxu0 0.0
        %1291 = vmatpush1.msra.mxu0 0.0
        %1292 = vmatprep.subr.mxu0 0.0
        %1293 = vmatpush1.msra.mxu0 0.0
        %1294 = vmatprep.subr.mxu0 0.0
        %1295 = vmatpush1.msra.mxu0 0.0
        %1296 = vmatprep.subr.mxu0 0.0
        %1297 = vmatpush1.msra.mxu0 0.0
        %1298 = vmatprep.subr.mxu0 0.0
        %1299 = vmatpush1.msra.mxu0 0.0
        %1300 = vmatprep.subr.mxu0 0.0
        %1301 = vmatpush1.msra.mxu0 0.0
        %1302 = vmatprep.subr.mxu0 0.0
        %1303 = vmatpush1.msra.mxu0 0.0
        %1304 = vmatprep.subr.mxu0 0.0
        %1305 = vmatpush1.msra.mxu0 0.0
        %1306 = vmatprep.subr.mxu0 0.0
        %1307 = vmatpush1.msra.mxu0 0.0
        %1308 = vmatprep.subr.mxu0 0.0
        %1309 = vmatpush1.msra.mxu0 0.0
        %1310 = vmatprep.subr.mxu0 0.0
        %1311 = vmatpush1.msra.mxu0 0.0
        %1312 = vmatprep.subr.mxu0 0.0
        %1313 = vmatpush1.msra.mxu0 0.0
        %1314 = vmatprep.subr.mxu0 0.0
        %1315 = vmatpush1.msra.mxu0 0.0
        %1316 = vmatprep.subr.mxu0 0.0
        %1317 = vmatpush1.msra.mxu0 0.0
        %1318 = vmatprep.subr.mxu0 0.0
        %1319 = vmatpush1.msra.mxu0 0.0
        %1320 = vmatprep.mubr.f32.mxu0 0.0
        %1321 = vmatmul.mubr.f32.gmra.mrb[0].mxu0 %v1254
        %v1322 = vpop.f32.mrb[0].mxu0
        %v1323 = vadd.f32 0.0, %v1322
        %v1324 = vpop.f32.mrb[0].mxu0
        %1325 = vdwg.mxu0
        %1326 = vrot.lane.b32.xlu0 %v810, 104
        %v1327 = vpop.permute.xlu0 %1326
        %1328 = vrot.lane.b32.xlu0 %v712, 104
        %v1329 = vpop.permute.xlu0 %1328
        %1330 = vrot.lane.b32.xlu0 %v717, 104
        %v1331 = vpop.permute.xlu0 %1330
        %v1332 = vsel %vm812, %v1327, 0
        %v1334 = vsel %vm812, %v1329, 0
        %v1336 = vsel %vm812, %v1331, 0
        %1338 = vmatprep.subr.mxu0 0.0
        %1339 = vmatpush1.xpose.msra.mxu0 %v1334
        %1340 = vmatprep.subr.mxu0 0.0
        %1341 = vmatpush1.xpose.msra.mxu0 %v1336
        %1342 = vmatprep.subr.mxu0 0.0
        %1343 = vmatpush1.xpose.msra.mxu0 0.0
        %1344 = vmatprep.subr.mxu0 0.0
        %1345 = vmatpush1.xpose.msra.mxu0 0.0
        %1346 = vmatprep.subr.mxu0 0.0
        %1347 = vmatpush1.xpose.msra.mxu0 0.0
        %1348 = vmatprep.subr.mxu0 0.0
        %1349 = vmatpush1.xpose.msra.mxu0 0.0
        %1350 = vmatprep.subr.mxu0 0.0
        %1351 = vmatpush1.xpose.msra.mxu0 0.0
        %1352 = vmatprep.subr.mxu0 0.0
        %1353 = vmatpush1.xpose.msra.mxu0 0.0
        %1354 = vmatprep.subr.mxu0 0.0
        %1355 = vmatpush1.xpose.msra.mxu0 0.0
        %1356 = vmatprep.subr.mxu0 0.0
        %1357 = vmatpush1.xpose.msra.mxu0 0.0
        %1358 = vmatprep.subr.mxu0 0.0
        %1359 = vmatpush1.xpose.msra.mxu0 0.0
        %1360 = vmatprep.subr.mxu0 0.0
        %1361 = vmatpush1.xpose.msra.mxu0 0.0
        %1362 = vmatprep.subr.mxu0 0.0
        %1363 = vmatpush1.xpose.msra.mxu0 0.0
        %1364 = vmatprep.subr.mxu0 0.0
        %1365 = vmatpush1.xpose.msra.mxu0 0.0
        %1366 = vmatprep.subr.mxu0 0.0
        %1367 = vmatpush1.xpose.msra.mxu0 0.0
        %1368 = vmatprep.subr.mxu0 0.0
        %1369 = vmatpush1.xpose.msra.mxu0 0.0
        %1370 = vmatprep.subr.mxu0 0.0
        %1371 = vmatpush1.xpose.msra.mxu0 0.0
        %1372 = vmatprep.subr.mxu0 0.0
        %1373 = vmatpush1.xpose.msra.mxu0 0.0
        %1374 = vmatprep.subr.mxu0 0.0
        %1375 = vmatpush1.xpose.msra.mxu0 0.0
        %1376 = vmatprep.subr.mxu0 0.0
        %1377 = vmatpush1.xpose.msra.mxu0 0.0
        %1378 = vmatprep.subr.mxu0 0.0
        %1379 = vmatpush1.xpose.msra.mxu0 0.0
        %1380 = vmatprep.subr.mxu0 0.0
        %1381 = vmatpush1.xpose.msra.mxu0 0.0
        %1382 = vmatprep.subr.mxu0 0.0
        %1383 = vmatpush1.xpose.msra.mxu0 0.0
        %1384 = vmatprep.subr.mxu0 0.0
        %1385 = vmatpush1.xpose.msra.mxu0 0.0
        %1386 = vmatprep.subr.mxu0 0.0
        %1387 = vmatpush1.xpose.msra.mxu0 0.0
        %1388 = vmatprep.subr.mxu0 0.0
        %1389 = vmatpush1.xpose.msra.mxu0 0.0
        %1390 = vmatprep.subr.mxu0 0.0
        %1391 = vmatpush1.xpose.msra.mxu0 0.0
        %1392 = vmatprep.subr.mxu0 0.0
        %1393 = vmatpush1.xpose.msra.mxu0 0.0
        %1394 = vmatprep.subr.mxu0 0.0
        %1395 = vmatpush1.xpose.msra.mxu0 0.0
        %1396 = vmatprep.subr.mxu0 0.0
        %1397 = vmatpush1.xpose.msra.mxu0 0.0
        %1398 = vmatprep.subr.mxu0 0.0
        %1399 = vmatpush1.xpose.msra.mxu0 0.0
        %1400 = vmatprep.subr.mxu0 0.0
        %1401 = vmatpush1.xpose.msra.mxu0 0.0
        %1402 = vmatprep.mubr.f32.mxu0 0.0
        %1403 = vmatmul.mubr.f32.gmra.mrb[0].mxu0 %v1332
        %v1404 = vpop.f32.mrb[0].mxu0
        %v1405 = vadd.f32 %v811, %v1404
        %v1406 = vpop.f32.mrb[0].mxu0
        %1407 = vdwg.mxu0
        %v1408 = vsel %vm892, %v1405, -inf
        %1409 = vmax.xlane.f32.xlu0 %v1408
        %v1410 = vpop.xlane.xlu0 %1409
        %v1411 = vsub.f32 %v1405, %v1410
        %v1412 = vmul.f32 %v1411, 1.442695
        %v1413 = vpow.pop %v1412
        %v1414 = vsel %vm892, %v1413, 0.0
        %1415 = vadd.xlane.f32.xlu0 %v1414
        %v1416 = vpop.xlane.xlu0 %1415
        %v1417 = vrcp.pop %v1416
        %v1418 = vmul.f32 %v1413, %v1417
        %v1419 = vadd.f32 %v1246, %v1418
        %1420 = vrot.lane.b32.xlu0 %v802, 104
        %v1421 = vpop.permute.xlu0 %1420
        %1422 = vrot.lane.b32.xlu0 %v807, 104
        %v1423 = vpop.permute.xlu0 %1422
        %v1427 = vsel %vm892, %v1418, 0
        %1429 = vmatprep.subr.mxu0 0.0
        %1430 = vmatpush1.msra.mxu0 %v1421
        %1431 = vmatprep.subr.mxu0 0.0
        %1432 = vmatpush1.msra.mxu0 %v1423
        %1433 = vmatprep.subr.mxu0 0.0
        %1434 = vmatpush1.msra.mxu0 0.0
        %1435 = vmatprep.subr.mxu0 0.0
        %1436 = vmatpush1.msra.mxu0 0.0
        %1437 = vmatprep.subr.mxu0 0.0
        %1438 = vmatpush1.msra.mxu0 0.0
        %1439 = vmatprep.subr.mxu0 0.0
        %1440 = vmatpush1.msra.mxu0 0.0
        %1441 = vmatprep.subr.mxu0 0.0
        %1442 = vmatpush1.msra.mxu0 0.0
        %1443 = vmatprep.subr.mxu0 0.0
        %1444 = vmatpush1.msra.mxu0 0.0
        %1445 = vmatprep.subr.mxu0 0.0
        %1446 = vmatpush1.msra.mxu0 0.0
        %1447 = vmatprep.subr.mxu0 0.0
        %1448 = vmatpush1.msra.mxu0 0.0
        %1449 = vmatprep.subr.mxu0 0.0
        %1450 = vmatpush1.msra.mxu0 0.0
        %1451 = vmatprep.subr.mxu0 0.0
        %1452 = vmatpush1.msra.mxu0 0.0
        %1453 = vmatprep.subr.mxu0 0.0
        %1454 = vmatpush1.msra.mxu0 0.0
        %1455 = vmatprep.subr.mxu0 0.0
        %1456 = vmatpush1.msra.mxu0 0.0
        %1457 = vmatprep.subr.mxu0 0.0
        %1458 = vmatpush1.msra.mxu0 0.0
        %1459 = vmatprep.subr.mxu0 0.0
        %1460 = vmatpush1.msra.mxu0 0.0
        %1461 = vmatprep.subr.mxu0 0.0
        %1462 = vmatpush1.msra.mxu0 0.0
        %1463 = vmatprep.subr.mxu0 0.0
        %1464 = vmatpush1.msra.mxu0 0.0
        %1465 = vmatprep.subr.mxu0 0.0
        %1466 = vmatpush1.msra.mxu0 0.0
        %1467 = vmatprep.subr.mxu0 0.0
        %1468 = vmatpush1.msra.mxu0 0.0
        %1469 = vmatprep.subr.mxu0 0.0
        %1470 = vmatpush1.msra.mxu0 0.0
        %1471 = vmatprep.subr.mxu0 0.0
        %1472 = vmatpush1.msra.mxu0 0.0
        %1473 = vmatprep.subr.mxu0 0.0
        %1474 = vmatpush1.msra.mxu0 0.0
        %1475 = vmatprep.subr.mxu0 0.0
        %1476 = vmatpush1.msra.mxu0 0.0
        %1477 = vmatprep.subr.mxu0 0.0
        %1478 = vmatpush1.msra.mxu0 0.0
        %1479 = vmatprep.subr.mxu0 0.0
        %1480 = vmatpush1.msra.mxu0 0.0
        %1481 = vmatprep.subr.mxu0 0.0
        %1482 = vmatpush1.msra.mxu0 0.0
        %1483 = vmatprep.subr.mxu0 0.0
        %1484 = vmatpush1.msra.mxu0 0.0
        %1485 = vmatprep.subr.mxu0 0.0
        %1486 = vmatpush1.msra.mxu0 0.0
        %1487 = vmatprep.subr.mxu0 0.0
        %1488 = vmatpush1.msra.mxu0 0.0
        %1489 = vmatprep.subr.mxu0 0.0
        %1490 = vmatpush1.msra.mxu0 0.0
        %1491 = vmatprep.subr.mxu0 0.0
        %1492 = vmatpush1.msra.mxu0 0.0
        %1493 = vmatprep.mubr.f32.mxu0 0.0
        %1494 = vmatmul.mubr.f32.gmra.mrb[0].mxu0 %v1427
        %v1495 = vpop.f32.mrb[0].mxu0
        %v1496 = vadd.f32 0.0, %v1495
        %v1497 = vpop.f32.mrb[0].mxu0
        %1498 = vdwg.mxu0
        %v1499 = vmul.f32 %v1419, 0.25
        %1500 = vst.msk [vmem:[%s454] sm:$0xff] %vm892, %v1499
        %1502 = vrot.lane.b32.xlu0 %v1150, 8
        %v1503 = vpop.permute.xlu0 %1502
        %1506 = vrot.lane.b32.xlu0 %v1323, 16
        %v1507 = vpop.permute.xlu0 %1506
        %1510 = vrot.lane.b32.xlu0 %v1496, 24
        %v1511 = vpop.permute.xlu0 %1510
        %v1513 = vsel %vm812, %v975, %v1503
        %v1514 = vsel %vm892, %v1513, %v1507
        %vm1515 = vcmask 195584
        %v1516 = vsel %vm1515, %v1514, %v1511
        %v1517 = vld [vmem:[%s5] sm:$0xff]
        %v1518 = vld [vmem:[%s5 + $0x8] sm:$0xff]
        %v1519 = vld [vmem:[%s5 + $0x10] sm:$0xff]
        %v1520 = vld [vmem:[%s5 + $0x18] sm:$0xff]
        %v1521 = vld [vmem:[%s6] sm:$0x1]
        %v1523 = vlaneseq
        %v1524 = vshrl.u32 %v1523, 7
        %v1525 = vsub.s32 0, %v1524
        %v1526 = vrot.slane %v1521, %v1525
        %v1529 = vsel %vm471, %v1516, 0
        %1531 = vmatprep.subr.mxu0 0.0
        %1532 = vmatpush1.msra.mxu0 %v1517
        %1533 = vmatprep.subr.mxu0 0.0
        %1534 = vmatpush1.msra.mxu0 %v1518
        %1535 = vmatprep.subr.mxu0 0.0
        %1536 = vmatpush1.msra.mxu0 %v1519
        %1537 = vmatprep.subr.mxu0 0.0
        %1538 = vmatpush1.msra.mxu0 %v1520
        %1539 = vmatprep.subr.mxu0 0.0
        %1540 = vmatpush1.msra.mxu0 0.0
        %1541 = vmatprep.subr.mxu0 0.0
        %1542 = vmatpush1.msra.mxu0 0.0
        %1543 = vmatprep.subr.mxu0 0.0
        %1544 = vmatpush1.msra.mxu0 0.0
        %1545 = vmatprep.subr.mxu0 0.0
        %1546 = vmatpush1.msra.mxu0 0.0
        %1547 = vmatprep.subr.mxu0 0.0
        %1548 = vmatpush1.msra.mxu0 0.0
        %1549 = vmatprep.subr.mxu0 0.0
        %1550 = vmatpush1.msra.mxu0 0.0
        %1551 = vmatprep.subr.mxu0 0.0
        %1552 = vmatpush1.msra.mxu0 0.0
        %1553 = vmatprep.subr.mxu0 0.0
        %1554 = vmatpush1.msra.mxu0 0.0
        %1555 = vmatprep.subr.mxu0 0.0
        %1556 = vmatpush1.msra.mxu0 0.0
        %1557 = vmatprep.subr.mxu0 0.0
        %1558 = vmatpush1.msra.mxu0 0.0
        %1559 = vmatprep.subr.mxu0 0.0
        %1560 = vmatpush1.msra.mxu0 0.0
        %1561 = vmatprep.subr.mxu0 0.0
        %1562 = vmatpush1.msra.mxu0 0.0
        %1563 = vmatprep.subr.mxu0 0.0
        %1564 = vmatpush1.msra.mxu0 0.0
        %1565 = vmatprep.subr.mxu0 0.0
        %1566 = vmatpush1.msra.mxu0 0.0
        %1567 = vmatprep.subr.mxu0 0.0
        %1568 = vmatpush1.msra.mxu0 0.0
        %1569 = vmatprep.subr.mxu0 0.0
        %1570 = vmatpush1.msra.mxu0 0.0
        %1571 = vmatprep.subr.mxu0 0.0
        %1572 = vmatpush1.msra.mxu0 0.0
        %1573 = vmatprep.subr.mxu0 0.0
        %1574 = vmatpush1.msra.mxu0 0.0
        %1575 = vmatprep.subr.mxu0 0.0
        %1576 = vmatpush1.msra.mxu0 0.0
        %1577 = vmatprep.subr.mxu0 0.0
        %1578 = vmatpush1.msra.mxu0 0.0
        %1579 = vmatprep.subr.mxu0 0.0
        %1580 = vmatpush1.msra.mxu0 0.0
        %1581 = vmatprep.subr.mxu0 0.0
        %1582 = vmatpush1.msra.mxu0 0.0
        %1583 = vmatprep.subr.mxu0 0.0
        %1584 = vmatpush1.msra.mxu0 0.0
        %1585 = vmatprep.subr.mxu0 0.0
        %1586 = vmatpush1.msra.mxu0 0.0
        %1587 = vmatprep.subr.mxu0 0.0
        %1588 = vmatpush1.msra.mxu0 0.0
        %1589 = vmatprep.subr.mxu0 0.0
        %1590 = vmatpush1.msra.mxu0 0.0
        %1591 = vmatprep.subr.mxu0 0.0
        %1592 = vmatpush1.msra.mxu0 0.0
        %1593 = vmatprep.subr.mxu0 0.0
        %1594 = vmatpush1.msra.mxu0 0.0
        %1595 = vmatprep.mubr.f32.mxu0 0.0
        %1596 = vmatmul.mubr.f32.gmra.mrb[0].mxu0 %v1529
        %v1597 = vpop.f32.mrb[0].mxu0
        %v1598 = vadd.f32 %v1526, %v1597
        %v1599 = vpop.f32.mrb[0].mxu0
        %1600 = vdwg.mxu0
        %v1601 = vadd.f32 %v495, %v1598
        %v1602 = vsel %vm471, %v1601, 0.0
        %1603 = vadd.xlane.f32.xlu0 %v1602
        %v1604 = vpop.xlane.xlu0 %1603
        %v1605 = vmul.f32 %v1604, %v475
        %v1606 = vsub.f32 %v1601, %v1605
        %v1607 = vmul.f32 %v1606, %v1606
        %v1608 = vsel %vm471, %v1607, 0.0
        %1609 = vadd.xlane.f32.xlu0 %v1608
        %v1610 = vpop.xlane.xlu0 %1609
        %v1611 = vmul.f32 %v1610, %v475
        %v1612 = vadd.f32 %v1611, 1e-05
        %v1613 = vrsqrt.pop %v1612
        %v1614 = vmul.f32 %v1606, %v1613
        %v1615 = vlaneseq
        %v1616 = vshrl.u32 %v1615, 7
        %v1617 = vsub.s32 4, %v1616
        %v1618 = vrot.slane %v469, %v1617
        %v1619 = vmul.f32 %v1614, %v1618
        %v1620 = vlaneseq
        %v1621 = vshrl.u32 %v1620, 7
        %v1622 = vsub.s32 5, %v1621
        %v1623 = vrot.slane %v469, %v1622
        %v1624 = vadd.f32 %v1619, %v1623
        %v1625 = vld [vmem:[%s7] sm:$0xff]
        %v1626 = vld [vmem:[%s7 + $0x8] sm:$0xff]
        %v1627 = vld [vmem:[%s7 + $0x10] sm:$0xff]
        %v1628 = vld [vmem:[%s7 + $0x18] sm:$0xff]
        %v1629 = vld [vmem:[%s8] sm:$0x1]
        %v1631 = vlaneseq
        %v1632 = vshrl.u32 %v1631, 7
        %v1633 = vsub.s32 0, %v1632
        %v1634 = vrot.slane %v1629, %v1633
        %v1637 = vsel %vm471, %v1624, 0
        %1639 = vmatprep.subr.mxu0 0.0
        %1640 = vmatpush1.msra.mxu0 %v1625
        %1641 = vmatprep.subr.mxu0 0.0
        %1642 = vmatpush1.msra.mxu0 %v1626
        %1643 = vmatprep.subr.mxu0 0.0
        %1644 = vmatpush1.msra.mxu0 %v1627
        %1645 = vmatprep.subr.mxu0 0.0
        %1646 = vmatpush1.msra.mxu0 %v1628
        %1647 = vmatprep.subr.mxu0 0.0
        %1648 = vmatpush1.msra.mxu0 0.0
        %1649 = vmatprep.subr.mxu0 0.0
        %1650 = vmatpush1.msra.mxu0 0.0
        %1651 = vmatprep.subr.mxu0 0.0
        %1652 = vmatpush1.msra.mxu0 0.0
        %1653 = vmatprep.subr.mxu0 0.0
        %1654 = vmatpush1.msra.mxu0 0.0
        %1655 = vmatprep.subr.mxu0 0.0
        %1656 = vmatpush1.msra.mxu0 0.0
        %1657 = vmatprep.subr.mxu0 0.0
        %1658 = vmatpush1.msra.mxu0 0.0
        %1659 = vmatprep.subr.mxu0 0.0
        %1660 = vmatpush1.msra.mxu0 0.0
        %1661 = vmatprep.subr.mxu0 0.0
        %1662 = vmatpush1.msra.mxu0 0.0
        %1663 = vmatprep.subr.mxu0 0.0
        %1664 = vmatpush1.msra.mxu0 0.0
        %1665 = vmatprep.subr.mxu0 0.0
        %1666 = vmatpush1.msra.mxu0 0.0
        %1667 = vmatprep.subr.mxu0 0.0
        %1668 = vmatpush1.msra.mxu0 0.0
        %1669 = vmatprep.subr.mxu0 0.0
        %1670 = vmatpush1.msra.mxu0 0.0
        %1671 = vmatprep.subr.mxu0 0.0
        %1672 = vmatpush1.msra.mxu0 0.0
        %1673 = vmatprep.subr.mxu0 0.0
        %1674 = vmatpush1.msra.mxu0 0.0
        %1675 = vmatprep.subr.mxu0 0.0
        %1676 = vmatpush1.msra.mxu0 0.0
        %1677 = vmatprep.subr.mxu0 0.0
        %1678 = vmatpush1.msra.mxu0 0.0
        %1679 = vmatprep.subr.mxu0 0.0
        %1680 = vmatpush1.msra.mxu0 0.0
        %1681 = vmatprep.subr.mxu0 0.0
        %1682 = vmatpush1.msra.mxu0 0.0
        %1683 = vmatprep.subr.mxu0 0.0
        %1684 = vmatpush1.msra.mxu0 0.0
        %1685 = vmatprep.subr.mxu0 0.0
        %1686 = vmatpush1.msra.mxu0 0.0
        %1687 = vmatprep.subr.mxu0 0.0
        %1688 = vmatpush1.msra.mxu0 0.0
        %1689 = vmatprep.subr.mxu0 0.0
        %1690 = vmatpush1.msra.mxu0 0.0
        %1691 = vmatprep.subr.mxu0 0.0
        %1692 = vmatpush1.msra.mxu0 0.0
        %1693 = vmatprep.subr.mxu0 0.0
        %1694 = vmatpush1.msra.mxu0 0.0
        %1695 = vmatprep.subr.mxu0 0.0
        %1696 = vmatpush1.msra.mxu0 0.0
        %1697 = vmatprep.subr.mxu0 0.0
        %1698 = vmatpush1.msra.mxu0 0.0
        %1699 = vmatprep.subr.mxu0 0.0
        %1700 = vmatpush1.msra.mxu0 0.0
        %1701 = vmatprep.subr.mxu0 0.0
        %1702 = vmatpush1.msra.mxu0 0.0
        %1703 = vmatprep.mubr.f32.mxu0 0.0
        %1704 = vmatmul.mubr.f32.gmra.mrb[0].mxu0 %v1637
        %v1705 = vpop.f32.mrb[0].mxu0
        %v1706 = vadd.f32 %v1634, %v1705
        %v1707 = vpop.f32.mrb[0].mxu0
        %1708 = vdwg.mxu0
        %v1709 = vmax.f32 %v1706, 0.0
        %v1710 = vld [vmem:[%s9] sm:$0xff]
        %v1711 = vld [vmem:[%s9 + $0x8] sm:$0xff]
        %v1712 = vld [vmem:[%s9 + $0x10] sm:$0xff]
        %v1713 = vld [vmem:[%s9 + $0x18] sm:$0xff]
        %v1714 = vld [vmem:[%s9 + $0x20] sm:$0xff]
        %v1715 = vld [vmem:[%s9 + $0x28] sm:$0xff]
        %v1716 = vld [vmem:[%s9 + $0x30] sm:$0xff]
        %v1717 = vld [vmem:[%s9 + $0x38] sm:$0xff]
        %v1718 = vld [vmem:[%s10] sm:$0x1]
        %v1720 = vlaneseq
        %v1721 = vshrl.u32 %v1720, 7
        %v1722 = vsub.s32 0, %v1721
        %v1723 = vrot.slane %v1718, %v1722
        %vm1725 = vcmask 523264
        %v1727 = vsel %vm1725, %v1709, 0
        %1729 = vmatprep.subr.mxu0 0.0
        %1730 = vmatpush1.msra.mxu0 %v1710
        %1731 = vmatprep.subr.mxu0 0.0
        %1732 = vmatpush1.msra.mxu0 %v1711
        %1733 = vmatprep.subr.mxu0 0.0
        %1734 = vmatpush1.msra.mxu0 %v1712
        %1735 = vmatprep.subr.mxu0 0.0
        %1736 = vmatpush1.msra.mxu0 %v1713
        %1737 = vmatprep.subr.mxu0 0.0
        %1738 = vmatpush1.msra.mxu0 %v1714
        %1739 = vmatprep.subr.mxu0 0.0
        %1740 = vmatpush1.msra.mxu0 %v1715
        %1741 = vmatprep.subr.mxu0 0.0
        %1742 = vmatpush1.msra.mxu0 %v1716
        %1743 = vmatprep.subr.mxu0 0.0
        %1744 = vmatpush1.msra.mxu0 %v1717
        %1745 = vmatprep.subr.mxu0 0.0
        %1746 = vmatpush1.msra.mxu0 0.0
        %1747 = vmatprep.subr.mxu0 0.0
        %1748 = vmatpush1.msra.mxu0 0.0
        %1749 = vmatprep.subr.mxu0 0.0
        %1750 = vmatpush1.msra.mxu0 0.0
        %1751 = vmatprep.subr.mxu0 0.0
        %1752 = vmatpush1.msra.mxu0 0.0
        %1753 = vmatprep.subr.mxu0 0.0
        %1754 = vmatpush1.msra.mxu0 0.0
        %1755 = vmatprep.subr.mxu0 0.0
        %1756 = vmatpush1.msra.mxu0 0.0
        %1757 = vmatprep.subr.mxu0 0.0
        %1758 = vmatpush1.msra.mxu0 0.0
        %1759 = vmatprep.subr.mxu0 0.0
        %1760 = vmatpush1.msra.mxu0 0.0
        %1761 = vmatprep.subr.mxu0 0.0
        %1762 = vmatpush1.msra.mxu0 0.0
        %1763 = vmatprep.subr.mxu0 0.0
        %1764 = vmatpush1.msra.mxu0 0.0
        %1765 = vmatprep.subr.mxu0 0.0
        %1766 = vmatpush1.msra.mxu0 0.0
        %1767 = vmatprep.subr.mxu0 0.0
        %1768 = vmatpush1.msra.mxu0 0.0
        %1769 = vmatprep.subr.mxu0 0.0
        %1770 = vmatpush1.msra.mxu0 0.0
        %1771 = vmatprep.subr.mxu0 0.0
        %1772 = vmatpush1.msra.mxu0 0.0
        %1773 = vmatprep.subr.mxu0 0.0
        %1774 = vmatpush1.msra.mxu0 0.0
        %1775 = vmatprep.subr.mxu0 0.0
        %1776 = vmatpush1.msra.mxu0 0.0
        %1777 = vmatprep.subr.mxu0 0.0
        %1778 = vmatpush1.msra.mxu0 0.0
        %1779 = vmatprep.subr.mxu0 0.0
        %1780 = vmatpush1.msra.mxu0 0.0
        %1781 = vmatprep.subr.mxu0 0.0
        %1782 = vmatpush1.msra.mxu0 0.0
        %1783 = vmatprep.subr.mxu0 0.0
        %1784 = vmatpush1.msra.mxu0 0.0
        %1785 = vmatprep.subr.mxu0 0.0
        %1786 = vmatpush1.msra.mxu0 0.0
        %1787 = vmatprep.subr.mxu0 0.0
        %1788 = vmatpush1.msra.mxu0 0.0
        %1789 = vmatprep.subr.mxu0 0.0
        %1790 = vmatpush1.msra.mxu0 0.0
        %1791 = vmatprep.subr.mxu0 0.0
        %1792 = vmatpush1.msra.mxu0 0.0
        %1793 = vmatprep.mubr.f32.mxu0 0.0
        %1794 = vmatmul.mubr.f32.gmra.mrb[0].mxu0 %v1727
        %v1795 = vpop.f32.mrb[0].mxu0
        %v1796 = vadd.f32 %v1723, %v1795
        %v1797 = vpop.f32.mrb[0].mxu0
        %1798 = vdwg.mxu0
        %v1799 = vadd.f32 %v1624, %v1796
        %v1800 = vsel %vm471, %v1799, 0.0
        %1801 = vadd.xlane.f32.xlu0 %v1800
        %v1802 = vpop.xlane.xlu0 %1801
        %v1803 = vmul.f32 %v1802, %v475
        %v1804 = vsub.f32 %v1799, %v1803
        %v1805 = vmul.f32 %v1804, %v1804
        %v1806 = vsel %vm471, %v1805, 0.0
        %1807 = vadd.xlane.f32.xlu0 %v1806
        %v1808 = vpop.xlane.xlu0 %1807
        %v1809 = vmul.f32 %v1808, %v475
        %v1810 = vadd.f32 %v1809, 1e-05
        %v1811 = vrsqrt.pop %v1810
        %v1812 = vmul.f32 %v1804, %v1811
        %v1813 = vlaneseq
        %v1814 = vshrl.u32 %v1813, 7
        %v1815 = vsub.s32 6, %v1814
        %v1816 = vrot.slane %v469, %v1815
        %v1817 = vmul.f32 %v1812, %v1816
        %v1818 = vlaneseq
        %v1819 = vshrl.u32 %v1818, 7
        %v1820 = vsub.s32 7, %v1819
        %v1821 = vrot.slane %v469, %v1820
        %v1822 = vadd.f32 %v1817, %v1821
        %1823 = vst.msk [vmem:[%s468] sm:$0xff] %vm471, %v1822
        %p1824 = scmp.lt.s32.totalorder %s28, 1
        %s1825 = scalar_select %p1824, %s28, 1
        %s1826 = smul.addr %s1825, 8
        %s1827 = scalar_lea.vmem %s12, %s1826
        %s1828 = sand.u32 %s324, 1
        %s1829 = scalar_lea.sflag [#allocation3], %s1828
        %s1830 = sand.u32 %s324, 1
        %s1831 = smul.addr %s1830, 8
        %s1832 = scalar_lea.vmem [#allocation2], %s1831
        // Predicated region
        $region69: #{frame_layer_forward.1} parent=67 // pred_check
          %p1833 = pneg %p308
        $region70: #{frame_layer_forward.1} parent=67 // pred_check_branch
          %1835 = sbr.rel (%p1833) target = $region72
        $region71: #{frame_layer_forward.1} parent=67 // pred_region
          _
        $region72: #{frame_layer_forward.1} parent=67 // pred_fallthru
          _
        // Predicated region
        $region73: #{frame_layer_forward.1} parent=67 // pred_check
          %p1836 = pneg %p334
        $region74: #{frame_layer_forward.1} parent=67 // pred_check_branch
          %1838 = sbr.rel (%p1836) target = $region76
        $region75: #{frame_layer_forward.1} parent=67 // pred_region
          %s1840 = ssub.s32 128, 128
          %1841 = vsyncadd %s1829, %s1840
          %s1842 = smul.addr %s28, 128
          %s1843 = scalar_lea.hbm %s13, %s1842
          %s1845 = sshll.u32 %s1832, 4
          %s1846 = int_to_ptr.vmem [resolvable:$true] %s1845
          %1848 = dma.vmem_to_hbm [thread:$0]  %s1846, 128, %s1843, %s1829
        $region76: #{frame_layer_forward.1} parent=67 // pred_fallthru
          _
      $region68: #{frame_layer_forward.1} parent=5 // pred_fallthru
        _
      %p1849 = scmp.le.s32.totalorder 2, %s23
      // Predicated region
      $region77: #{frame_layer_forward.1} parent=5 // pred_check
        %p1850 = pneg %p1849
      $region78: #{frame_layer_forward.1} parent=5 // pred_check_branch
        %1852 = sbr.rel (%p1850) target = $region80
      $region79: #{frame_layer_forward.1} parent=5 // pred_region
        %s1853 = ssub.s32 %s23, 2
        // Predicated region
        $region81: #{frame_layer_forward.1} parent=79 // pred_check
          %p1854 = pneg %p314
        $region82: #{frame_layer_forward.1} parent=79 // pred_check_branch
          %1856 = sbr.rel (%p1854) target = $region84
        $region83: #{frame_layer_forward.1} parent=79 // pred_region
          %p1857 = scmp.lt.s32.totalorder %s29, 1
          %s1858 = scalar_select %p1857, %s29, 1
          %s1859 = smul.addr %s1858, 8
          %s1860 = scalar_lea.vmem %s12, %s1859
        $region84: #{frame_layer_forward.1} parent=79 // pred_fallthru
          _
        // Predicated region
        $region85: #{frame_layer_forward.1} parent=79 // pred_check
          %p1861 = pneg %p340
        $region86: #{frame_layer_forward.1} parent=79 // pred_check_branch
          %1863 = sbr.rel (%p1861) target = $region88
        $region87: #{frame_layer_forward.1} parent=79 // pred_region
          %s1864 = sand.u32 %s325, 1
          %s1865 = scalar_lea.sflag [#allocation3], %s1864
          %s1866 = sand.u32 %s325, 1
          %s1867 = smul.addr %s1866, 8
          %s1868 = scalar_lea.vmem [#allocation2], %s1867
          %1869 = dma.done %s1865, 128
        $region88: #{frame_layer_forward.1} parent=79 // pred_fallthru
          _
      $region80: #{frame_layer_forward.1} parent=5 // pred_fallthru
        _
    $region6: #{frame_layer_forward.1} parent=1 // loop_footer
      %s27 = sadd.s32 1, %s23
    $region7: #{frame_layer_forward.1} parent=1 // loop_footer_branch
      %22 = sbr.rel target = $region3
    $region8: #{frame_layer_forward.1} parent=1 // loop_exit
      _
    %1870 = vsyncpa [#allocation3], 1
    %s1871 = scalar_lea.sflag [#allocation3], 1
    %1872 = vsyncpa %s1871, 1

</llo_original>
